<compile_context>
chip_gen: v5e
topology: v5e:2x2
jax: 0.10.0
libtpu: 0.0.40
codegen_flags: <defaults>
</compile_context>

<pallas_src>
from functools import lru_cache

import jax
import jax.numpy as jnp
from jax import lax
from jax.experimental import pallas as pl
from jax.experimental.pallas import tpu as pltpu

# ---- module-level "globals" used by the PyTorch source (defined deterministically here) ----
num_neuron = 128            # neurons, lane-aligned
num_S1 = num_neuron         # spike vector length (== num_neuron in this setup)
n_conn = 4                  # FR.shape[0] in the 2-D branch
I_max = 20.0                # input scaling
Simulation_time = 16        # Izhikevich simulation steps (compile-time constant)
TrickID = 0                 # 0 -> simulate the Izhikevich node (kernel path)
# TODO(synk): TrickID == 1 path uses a host-side Python lookup (spike_num_list[int(x.item())]);
#             it is a scalar .item() loop with no clean Pallas equivalent and is not implemented.

# IzhNodeMU parameters (param_* globals in the PyTorch source)
param_threshold = 30.0
param_a = 0.02
param_b = 0.2
param_c = -65.0
param_d = 8.0
param_mem = -70.0
param_u = param_b * param_mem
param_dt = 0.5

_MAX_TILE_B = 2048               # double-buffered blocks ~14 MiB -> fits every generation
_VMEM_LIMIT = 32 * 1024 * 1024   # raise v5e's 16 MiB default scoped VMEM; <= v7x physical
_CHUNK_ROWS = 64                 # register-resident chunk: mem/u/spike/drive ~= 32 live vregs


def _make_ainet_kernel(n_conn_, N, chunk_b, n_chunks):
    """Build the kernel body with all compile-time constants folded to Python floats."""
    DT = float(param_dt)
    C04 = DT * 0.04                  # dt*0.04
    CM = 1.0 + DT * 5.0              # (mem + dt*5*mem) folded
    DT_A = DT * param_a
    DT_A_B = DT_A * param_b          # dt*a*b
    ONE_M_DT_A = 1.0 - DT_A          # 1 - dt*a
    DRIVE0 = DT * 140.0              # dt*140 folded into the drive term
    INV_T = 1.0 / float(Simulation_time)

    def kernel(c_ref, fr_ref, w_ref, inp_ref, frn_ref, inpn_ref):
        # c_ref  : SMEM (1,) f32              -- C (runtime scalar; changing C does not recompile)
        # fr_ref : VMEM (TILE_B, n_conn*N)    -- FR, one contiguous HBM slab per grid step
        # w_ref  : VMEM (1, n_conn*N)         -- connection[i].weight (shared, resident)
        # inp_ref: VMEM (TILE_B, N)           -- per-sample input
        # frn_ref / inpn_ref: VMEM (TILE_B, N) outputs
        c_val = c_ref[0]
        # Hoisted per-connection weight rows (tiny, live for the whole tile).
        w_rows = [w_ref[:, pl.ds(i * N, N)] for i in range(n_conn_)]   # each (1, N)

        def process_chunk(r0):
            rows = pl.ds(r0, chunk_b)

            # FR_W = sum_i FR[i] * connection[i].weight  (unrolled multiply-accumulate)
            fr_w = fr_ref[rows, pl.ds(0, N)] * w_rows[0]
            for i in range(1, n_conn_):
                fr_w = fr_w + fr_ref[rows, pl.ds(i * N, N)] * w_rows[i]

            # sf = relu(tanh(FR_W))  -- tanh on EUP, max on VPU
            sf = jnp.maximum(jnp.tanh(fr_w), 0.0)

            inp = inp_ref[rows, :]
            input_n = jnp.maximum(inp - c_val * (inp - sf), 0.0)   # -C*(input - sf) + input, clamped
            inpn_ref[rows, :] = input_n

            input_r = jnp.round(input_n * I_max)
            drive = DRIVE0 + DT * input_r                          # dt*(140 + input_r)

            # node.n_reset()
            mem = jnp.full_like(inp, param_mem)
            u = jnp.full_like(inp, param_u)
            spike = jnp.zeros_like(inp)

            # Izhikevich (IzhNodeMU) simulation, statically unrolled; state stays in vregs.
            # TODO(synk): update order assumed from BrainCog's IzhNodeMU (integrate mem, then u,
            #             then threshold / reset-to-c / u+=d); verify against the exact node
            #             implementation if bit-accuracy matters.
            for _ in range(Simulation_time):
                mem = C04 * (mem * mem) + CM * mem - DT * u + drive
                u = ONE_M_DT_A * u + DT_A_B * mem                  # == u + dt*a*(b*mem - u)
                fired = mem > param_threshold
                mem = jnp.where(fired, param_c, mem)               # reset fired neurons to c
                u = jnp.where(fired, u + param_d, u)               # u += d on spike
                spike = jnp.where(fired, spike + 1.0, spike)

            frn_ref[rows, :] = spike * INV_T                       # Spike / Simulation_time

        if n_chunks == 1:
            process_chunk(0)
        else:
            def body(ci, carry):
                process_chunk(pl.multiple_of(ci * chunk_b, chunk_b))
                return carry
            lax.fori_loop(0, n_chunks, body, 0)

    return kernel


@lru_cache(maxsize=None)
def _build_ainet_call(B, tile_b, n_conn_, N, chunk_b):
    n_chunks = tile_b // chunk_b
    kernel = _make_ainet_kernel(n_conn_, N, chunk_b, n_chunks)
    call = pl.pallas_call(
        kernel,
        out_shape=(
            jax.ShapeDtypeStruct((B, N), jnp.float32),   # FR_n
            jax.ShapeDtypeStruct((B, N), jnp.float32),   # input_n
        ),
        grid=(B // tile_b,),
        in_specs=[
            pl.BlockSpec(memory_space=pltpu.MemorySpace.SMEM),             # C scalar
            pl.BlockSpec((tile_b, n_conn_ * N), lambda i: (i, 0)),         # FR (flattened, contiguous)
            pl.BlockSpec((1, n_conn_ * N), lambda i: (0, 0)),              # W (flattened, resident)
            pl.BlockSpec((tile_b, N), lambda i: (i, 0)),                   # input
        ],
        out_specs=(
            pl.BlockSpec((tile_b, N), lambda i: (i, 0)),                   # FR_n
            pl.BlockSpec((tile_b, N), lambda i: (i, 0)),                   # input_n
        ),
        compiler_params=pltpu.CompilerParams(
            # batch axis is independent -> v7x shards the grid across its 2 TensorCores
            dimension_semantics=("parallel",),
            vmem_limit_bytes=_VMEM_LIMIT,
        ),
    )
    return jax.jit(call)


def _as_f32(x):
    x = jnp.asarray(x)
    return x if x.dtype == jnp.float32 else x.astype(jnp.float32)


def _pick_tile_b(B):
    # Small batches: one block -- extra grid steps only add ~0.35 us/step + DMA setup.
    if B < 128:
        return B
    # Large batches: largest multiple-of-8 divisor of B that is <= min(_MAX_TILE_B, B//2).
    # >= 2 grid steps keeps both v7x TensorCores busy; the cap keeps double-buffered
    # blocks comfortably inside every generation's (scoped) VMEM.
    cap = min(_MAX_TILE_B, B // 2)
    d = (cap // 8) * 8
    while d >= 8:
        if B % d == 0:
            return d
        d -= 8
    return B


def _pick_chunk_b(tile_b):
    for c in (_CHUNK_ROWS, 32, 16, 8):
        if tile_b % c == 0:
            return c
    return tile_b


def ainet_forward(inp, FR, W, C, *, tile_b=None):
    """AINet forward.

    inp: (B, num_neuron) batched, or (num_neuron,) single sample.
    FR : preferred (B, n_conn, num_neuron); also accepts (n_conn, B, num_neuron)
         (transposed once on the host), or (n_conn, num_neuron) / (num_neuron,)
         for a single sample (matching the PyTorch 2-D / 1-D FR branches).
    W  : (n_conn, num_neuron) or (num_neuron,)  -- connection[i].weight.
    C  : scalar (runtime value passed via SMEM; changing C does NOT recompile).
    Returns (FR_n, input_n) with the same batch layout as `inp`.
    """
    inp = _as_f32(inp)
    FR = _as_f32(FR)
    W = _as_f32(W)

    single = inp.ndim == 1
    if single:
        inp = inp[None, :]
    B, N = inp.shape

    # Normalize FR to (B, n_conn, N).
    if FR.ndim == 1:                       # single sample, single connection
        FR = FR[None, None, :]
    elif FR.ndim == 2:
        if single:                         # single sample, n_conn connections
            FR = FR[None, :, :]
        else:                              # batched, single connection
            FR = FR[:, None, :]
    elif FR.ndim == 3 and FR.shape[0] != B and FR.shape[1] == B:
        FR = jnp.transpose(FR, (1, 0, 2))  # legacy (n_conn, B, N) layout -> (B, n_conn, N)
    n_conn_ = FR.shape[1]
    assert FR.shape == (B, n_conn_, N), f"FR shape {FR.shape} incompatible with input {(B, N)}"

    if W.ndim == 1:
        W = W[None, :]
    assert W.shape == (n_conn_, N), f"W shape {W.shape} incompatible with FR {FR.shape}"

    if tile_b is None:
        tile_b = _pick_tile_b(B)
    assert B % tile_b == 0 and (tile_b == B or tile_b % 8 == 0), \
        f"tile_b={tile_b} must divide B={B} and be a multiple of 8 (or equal B)"
    chunk_b = _pick_chunk_b(tile_b)

    fr_flat = FR.reshape(B, n_conn_ * N)         # free reshape for the (B, n_conn, N) layout
    w_flat = W.reshape(1, n_conn_ * N)
    c_arr = jnp.asarray(C, dtype=jnp.float32).reshape(1)

    call = _build_ainet_call(B, tile_b, n_conn_, N, chunk_b)
    frn, inpn = call(c_arr, fr_flat, w_flat, inp)
    if single:
        return frn[0], inpn[0]
    return frn, inpn


if __name__ == "__main__":
    key = jax.random.PRNGKey(0)
    k1, k2, k3, k4 = jax.random.split(key, 4)

    # Batched path: small batch -> single block, grid=(1,) (no forced split).
    B = 32
    FR_b = jax.random.uniform(k1, (B, n_conn, num_neuron), dtype=jnp.float32)
    W = jax.random.uniform(k2, (n_conn, num_neuron), dtype=jnp.float32,
                           minval=-1.0, maxval=1.0)
    inp_b = jax.random.uniform(k3, (B, num_neuron), dtype=jnp.float32)

    FR_n, input_n = ainet_forward(inp_b, FR_b, W, 0.3)
    jax.block_until_ready((FR_n, input_n))
    assert FR_n.shape == (B, num_neuron) and input_n.shape == (B, num_neuron)

    # Changing C reuses the same compiled kernel (C is a runtime SMEM scalar).
    FR_n2, input_n2 = ainet_forward(inp_b, FR_b, W, 0.7)
    jax.block_until_ready((FR_n2, input_n2))
    assert FR_n2.shape == (B, num_neuron)

    # Single-sample path (original module call convention: 1-D per-neuron tensors).
    FR_1 = jax.random.uniform(k4, (n_conn, num_neuron), dtype=jnp.float32)
    fr1, in1 = ainet_forward(inp_b[0], FR_1, W, 0.3)
    jax.block_until_ready((fr1, in1))
    assert fr1.shape == (num_neuron,) and in1.shape == (num_neuron,)

    print("KERNEL_OK")
</pallas_src>

<mosaic_0001>
module attributes {stable_mosaic.version = 11 : i64} {
  func.func @kernel(%arg0: i32, %arg1: memref<1xf32, #tpu.memory_space<smem>>, %arg2: memref<32x512xf32, #tpu.memory_space<vmem>>, %arg3: memref<1x512xf32, #tpu.memory_space<vmem>>, %arg4: memref<32x128xf32, #tpu.memory_space<vmem>>, %arg5: memref<32x128xf32, #tpu.memory_space<vmem>>, %arg6: memref<32x128xf32, #tpu.memory_space<vmem>>) attributes {dimension_semantics = [#tpu.dimension_semantics<parallel>], iteration_bounds = array<i64: 1>, scalar_prefetch = 0 : i64, scratch_operands = 0 : i64, tpu.core_type = #tpu.core_type<tc>, window_params = [{transform_indices = @transform_0, window_bounds = array<i64: 1>}, {transform_indices = @transform_1, window_bounds = array<i64: 32, 512>}, {pipeline_mode = #tpu.pipeline_mode<synchronous>, transform_indices = @transform_2, window_bounds = array<i64: 1, 512>}, {transform_indices = @transform_3, window_bounds = array<i64: 32, 128>}, {transform_indices = @transform_4, window_bounds = array<i64: 32, 128>}, {transform_indices = @transform_5, window_bounds = array<i64: 32, 128>}]} {
    %c0 = arith.constant 0 : index
    %0 = memref.load %arg1[%c0] : memref<1xf32, #tpu.memory_space<smem>>
    %c0_0 = arith.constant 0 : index
    %c0_1 = arith.constant 0 : index
    %1 = vector.load %arg3[%c0_0, %c0_1] : memref<1x512xf32, #tpu.memory_space<vmem>>, vector<1x128xf32>
    %c0_2 = arith.constant 0 : index
    %c128 = arith.constant 128 : index
    %2 = vector.load %arg3[%c0_2, %c128] : memref<1x512xf32, #tpu.memory_space<vmem>>, vector<1x128xf32>
    %c0_3 = arith.constant 0 : index
    %c256 = arith.constant 256 : index
    %3 = vector.load %arg3[%c0_3, %c256] : memref<1x512xf32, #tpu.memory_space<vmem>>, vector<1x128xf32>
    %c0_4 = arith.constant 0 : index
    %c384 = arith.constant 384 : index
    %4 = vector.load %arg3[%c0_4, %c384] : memref<1x512xf32, #tpu.memory_space<vmem>>, vector<1x128xf32>
    %c0_5 = arith.constant 0 : index
    %c0_6 = arith.constant 0 : index
    %5 = vector.load %arg2[%c0_5, %c0_6] : memref<32x512xf32, #tpu.memory_space<vmem>>, vector<32x128xf32>
    %6 = vector.broadcast %1 : vector<1x128xf32> to vector<32x128xf32>
    %7 = arith.mulf %5, %6 : vector<32x128xf32>
    %c0_7 = arith.constant 0 : index
    %c128_8 = arith.constant 128 : index
    %8 = vector.load %arg2[%c0_7, %c128_8] : memref<32x512xf32, #tpu.memory_space<vmem>>, vector<32x128xf32>
    %9 = vector.broadcast %2 : vector<1x128xf32> to vector<32x128xf32>
    %10 = arith.mulf %8, %9 : vector<32x128xf32>
    %11 = arith.addf %7, %10 : vector<32x128xf32>
    %c0_9 = arith.constant 0 : index
    %c256_10 = arith.constant 256 : index
    %12 = vector.load %arg2[%c0_9, %c256_10] : memref<32x512xf32, #tpu.memory_space<vmem>>, vector<32x128xf32>
    %13 = vector.broadcast %3 : vector<1x128xf32> to vector<32x128xf32>
    %14 = arith.mulf %12, %13 : vector<32x128xf32>
    %15 = arith.addf %11, %14 : vector<32x128xf32>
    %c0_11 = arith.constant 0 : index
    %c384_12 = arith.constant 384 : index
    %16 = vector.load %arg2[%c0_11, %c384_12] : memref<32x512xf32, #tpu.memory_space<vmem>>, vector<32x128xf32>
    %17 = vector.broadcast %4 : vector<1x128xf32> to vector<32x128xf32>
    %18 = arith.mulf %16, %17 : vector<32x128xf32>
    %19 = arith.addf %15, %18 : vector<32x128xf32>
    %20 = math.tanh %19 : vector<32x128xf32>
    %cst = arith.constant 0.000000e+00 : f32
    %21 = vector.broadcast %cst : f32 to vector<32x128xf32>
    %22 = arith.maximumf %20, %21 : vector<32x128xf32>
    %c0_13 = arith.constant 0 : index
    %c0_14 = arith.constant 0 : index
    %23 = vector.load %arg4[%c0_13, %c0_14] : memref<32x128xf32, #tpu.memory_space<vmem>>, vector<32x128xf32>
    %24 = arith.subf %23, %22 : vector<32x128xf32>
    %25 = vector.broadcast %0 : f32 to vector<32x128xf32>
    %26 = arith.mulf %25, %24 : vector<32x128xf32>
    %27 = arith.subf %23, %26 : vector<32x128xf32>
    %cst_15 = arith.constant 0.000000e+00 : f32
    %28 = vector.broadcast %cst_15 : f32 to vector<32x128xf32>
    %29 = arith.maximumf %27, %28 : vector<32x128xf32>
    %c0_16 = arith.constant 0 : index
    %c0_17 = arith.constant 0 : index
    %30 = vector.load %arg6[%c0_16, %c0_17] : memref<32x128xf32, #tpu.memory_space<vmem>>, vector<32x128xf32>
    tpu.vector_store %arg6[%c0_16, %c0_17], %29 {strides = array<i32>} : memref<32x128xf32, #tpu.memory_space<vmem>>, vector<32x128xf32>,
    %cst_18 = arith.constant 2.000000e+01 : f32
    %31 = vector.broadcast %cst_18 : f32 to vector<32x128xf32>
    %32 = arith.mulf %29, %31 : vector<32x128xf32>
    %33 = math.roundeven %32 : vector<32x128xf32>
    %cst_19 = arith.constant 5.000000e-01 : f32
    %34 = vector.broadcast %cst_19 : f32 to vector<32x128xf32>
    %35 = arith.mulf %34, %33 : vector<32x128xf32>
    %cst_20 = arith.constant 7.000000e+01 : f32
    %36 = vector.broadcast %cst_20 : f32 to vector<32x128xf32>
    %37 = arith.addf %36, %35 : vector<32x128xf32>
    %cst_21 = arith.constant -7.000000e+01 : f32
    %38 = vector.broadcast %cst_21 : f32 to vector<32x128xf32>
    %cst_22 = arith.constant -1.400000e+01 : f32
    %39 = vector.broadcast %cst_22 : f32 to vector<32x128xf32>
    %cst_23 = arith.constant 0.000000e+00 : f32
    %40 = vector.broadcast %cst_23 : f32 to vector<32x128xf32>
    %41 = arith.mulf %38, %38 : vector<32x128xf32>
    %cst_24 = arith.constant 2.000000e-02 : f32
    %42 = vector.broadcast %cst_24 : f32 to vector<32x128xf32>
    %43 = arith.mulf %42, %41 : vector<32x128xf32>
    %cst_25 = arith.constant 3.500000e+00 : f32
    %44 = vector.broadcast %cst_25 : f32 to vector<32x128xf32>
    %45 = arith.mulf %44, %38 : vector<32x128xf32>
    %46 = arith.addf %43, %45 : vector<32x128xf32>
    %cst_26 = arith.constant 5.000000e-01 : f32
    %47 = vector.broadcast %cst_26 : f32 to vector<32x128xf32>
    %48 = arith.mulf %47, %39 : vector<32x128xf32>
    %49 = arith.subf %46, %48 : vector<32x128xf32>
    %50 = arith.addf %49, %37 : vector<32x128xf32>
    %cst_27 = arith.constant 9.900000e-01 : f32
    %51 = vector.broadcast %cst_27 : f32 to vector<32x128xf32>
    %52 = arith.mulf %51, %39 : vector<32x128xf32>
    %cst_28 = arith.constant 2.000000e-03 : f32
    %53 = vector.broadcast %cst_28 : f32 to vector<32x128xf32>
    %54 = arith.mulf %53, %50 : vector<32x128xf32>
    %55 = arith.addf %52, %54 : vector<32x128xf32>
    %cst_29 = arith.constant 3.000000e+01 : f32
    %56 = vector.broadcast %cst_29 : f32 to vector<32x128xf32>
    %57 = arith.cmpf ogt, %50, %56 : vector<32x128xf32>
    %cst_30 = arith.constant -6.500000e+01 : f32
    %58 = vector.broadcast %cst_30 : f32 to vector<32x128xf32>
    %59 = arith.select %57, %58, %50 : vector<32x128xi1>, vector<32x128xf32>
    %cst_31 = arith.constant 8.000000e+00 : f32
    %60 = vector.broadcast %cst_31 : f32 to vector<32x128xf32>
    %61 = arith.addf %55, %60 : vector<32x128xf32>
    %62 = arith.select %57, %61, %55 : vector<32x128xi1>, vector<32x128xf32>
    %cst_32 = arith.constant 1.000000e+00 : f32
    %63 = vector.broadcast %cst_32 : f32 to vector<32x128xf32>
    %64 = arith.addf %40, %63 : vector<32x128xf32>
    %65 = arith.select %57, %64, %40 : vector<32x128xi1>, vector<32x128xf32>
    %66 = arith.mulf %59, %59 : vector<32x128xf32>
    %cst_33 = arith.constant 2.000000e-02 : f32
    %67 = vector.broadcast %cst_33 : f32 to vector<32x128xf32>
    %68 = arith.mulf %67, %66 : vector<32x128xf32>
    %cst_34 = arith.constant 3.500000e+00 : f32
    %69 = vector.broadcast %cst_34 : f32 to vector<32x128xf32>
    %70 = arith.mulf %69, %59 : vector<32x128xf32>
    %71 = arith.addf %68, %70 : vector<32x128xf32>
    %cst_35 = arith.constant 5.000000e-01 : f32
    %72 = vector.broadcast %cst_35 : f32 to vector<32x128xf32>
    %73 = arith.mulf %72, %62 : vector<32x128xf32>
    %74 = arith.subf %71, %73 : vector<32x128xf32>
    %75 = arith.addf %74, %37 : vector<32x128xf32>
    %cst_36 = arith.constant 9.900000e-01 : f32
    %76 = vector.broadcast %cst_36 : f32 to vector<32x128xf32>
    %77 = arith.mulf %76, %62 : vector<32x128xf32>
    %cst_37 = arith.constant 2.000000e-03 : f32
    %78 = vector.broadcast %cst_37 : f32 to vector<32x128xf32>
    %79 = arith.mulf %78, %75 : vector<32x128xf32>
    %80 = arith.addf %77, %79 : vector<32x128xf32>
    %cst_38 = arith.constant 3.000000e+01 : f32
    %81 = vector.broadcast %cst_38 : f32 to vector<32x128xf32>
    %82 = arith.cmpf ogt, %75, %81 : vector<32x128xf32>
    %cst_39 = arith.constant -6.500000e+01 : f32
    %83 = vector.broadcast %cst_39 : f32 to vector<32x128xf32>
    %84 = arith.select %82, %83, %75 : vector<32x128xi1>, vector<32x128xf32>
    %cst_40 = arith.constant 8.000000e+00 : f32
    %85 = vector.broadcast %cst_40 : f32 to vector<32x128xf32>
    %86 = arith.addf %80, %85 : vector<32x128xf32>
    %87 = arith.select %82, %86, %80 : vector<32x128xi1>, vector<32x128xf32>
    %cst_41 = arith.constant 1.000000e+00 : f32
    %88 = vector.broadcast %cst_41 : f32 to vector<32x128xf32>
    %89 = arith.addf %65, %88 : vector<32x128xf32>
    %90 = arith.select %82, %89, %65 : vector<32x128xi1>, vector<32x128xf32>
    %91 = arith.mulf %84, %84 : vector<32x128xf32>
    %cst_42 = arith.constant 2.000000e-02 : f32
    %92 = vector.broadcast %cst_42 : f32 to vector<32x128xf32>
    %93 = arith.mulf %92, %91 : vector<32x128xf32>
    %cst_43 = arith.constant 3.500000e+00 : f32
    %94 = vector.broadcast %cst_43 : f32 to vector<32x128xf32>
    %95 = arith.mulf %94, %84 : vector<32x128xf32>
    %96 = arith.addf %93, %95 : vector<32x128xf32>
    %cst_44 = arith.constant 5.000000e-01 : f32
    %97 = vector.broadcast %cst_44 : f32 to vector<32x128xf32>
    %98 = arith.mulf %97, %87 : vector<32x128xf32>
    %99 = arith.subf %96, %98 : vector<32x128xf32>
    %100 = arith.addf %99, %37 : vector<32x128xf32>
    %cst_45 = arith.constant 9.900000e-01 : f32
    %101 = vector.broadcast %cst_45 : f32 to vector<32x128xf32>
    %102 = arith.mulf %101, %87 : vector<32x128xf32>
    %cst_46 = arith.constant 2.000000e-03 : f32
    %103 = vector.broadcast %cst_46 : f32 to vector<32x128xf32>
    %104 = arith.mulf %103, %100 : vector<32x128xf32>
    %105 = arith.addf %102, %104 : vector<32x128xf32>
    %cst_47 = arith.constant 3.000000e+01 : f32
    %106 = vector.broadcast %cst_47 : f32 to vector<32x128xf32>
    %107 = arith.cmpf ogt, %100, %106 : vector<32x128xf32>
    %cst_48 = arith.constant -6.500000e+01 : f32
    %108 = vector.broadcast %cst_48 : f32 to vector<32x128xf32>
    %109 = arith.select %107, %108, %100 : vector<32x128xi1>, vector<32x128xf32>
    %cst_49 = arith.constant 8.000000e+00 : f32
    %110 = vector.broadcast %cst_49 : f32 to vector<32x128xf32>
    %111 = arith.addf %105, %110 : vector<32x128xf32>
    %112 = arith.select %107, %111, %105 : vector<32x128xi1>, vector<32x128xf32>
    %cst_50 = arith.constant 1.000000e+00 : f32
    %113 = vector.broadcast %cst_50 : f32 to vector<32x128xf32>
    %114 = arith.addf %90, %113 : vector<32x128xf32>
    %115 = arith.select %107, %114, %90 : vector<32x128xi1>, vector<32x128xf32>
    %116 = arith.mulf %109, %109 : vector<32x128xf32>
    %cst_51 = arith.constant 2.000000e-02 : f32
    %117 = vector.broadcast %cst_51 : f32 to vector<32x128xf32>
    %118 = arith.mulf %117, %116 : vector<32x128xf32>
    %cst_52 = arith.constant 3.500000e+00 : f32
    %119 = vector.broadcast %cst_52 : f32 to vector<32x128xf32>
    %120 = arith.mulf %119, %109 : vector<32x128xf32>
    %121 = arith.addf %118, %120 : vector<32x128xf32>
    %cst_53 = arith.constant 5.000000e-01 : f32
    %122 = vector.broadcast %cst_53 : f32 to vector<32x128xf32>
    %123 = arith.mulf %122, %112 : vector<32x128xf32>
    %124 = arith.subf %121, %123 : vector<32x128xf32>
    %125 = arith.addf %124, %37 : vector<32x128xf32>
    %cst_54 = arith.constant 9.900000e-01 : f32
    %126 = vector.broadcast %cst_54 : f32 to vector<32x128xf32>
    %127 = arith.mulf %126, %112 : vector<32x128xf32>
    %cst_55 = arith.constant 2.000000e-03 : f32
    %128 = vector.broadcast %cst_55 : f32 to vector<32x128xf32>
    %129 = arith.mulf %128, %125 : vector<32x128xf32>
    %130 = arith.addf %127, %129 : vector<32x128xf32>
    %cst_56 = arith.constant 3.000000e+01 : f32
    %131 = vector.broadcast %cst_56 : f32 to vector<32x128xf32>
    %132 = arith.cmpf ogt, %125, %131 : vector<32x128xf32>
    %cst_57 = arith.constant -6.500000e+01 : f32
    %133 = vector.broadcast %cst_57 : f32 to vector<32x128xf32>
    %134 = arith.select %132, %133, %125 : vector<32x128xi1>, vector<32x128xf32>
    %cst_58 = arith.constant 8.000000e+00 : f32
    %135 = vector.broadcast %cst_58 : f32 to vector<32x128xf32>
    %136 = arith.addf %130, %135 : vector<32x128xf32>
    %137 = arith.select %132, %136, %130 : vector<32x128xi1>, vector<32x128xf32>
    %cst_59 = arith.constant 1.000000e+00 : f32
    %138 = vector.broadcast %cst_59 : f32 to vector<32x128xf32>
    %139 = arith.addf %115, %138 : vector<32x128xf32>
    %140 = arith.select %132, %139, %115 : vector<32x128xi1>, vector<32x128xf32>
    %141 = arith.mulf %134, %134 : vector<32x128xf32>
    %cst_60 = arith.constant 2.000000e-02 : f32
    %142 = vector.broadcast %cst_60 : f32 to vector<32x128xf32>
    %143 = arith.mulf %142, %141 : vector<32x128xf32>
    %cst_61 = arith.constant 3.500000e+00 : f32
    %144 = vector.broadcast %cst_61 : f32 to vector<32x128xf32>
    %145 = arith.mulf %144, %134 : vector<32x128xf32>
    %146 = arith.addf %143, %145 : vector<32x128xf32>
    %cst_62 = arith.constant 5.000000e-01 : f32
    %147 = vector.broadcast %cst_62 : f32 to vector<32x128xf32>
    %148 = arith.mulf %147, %137 : vector<32x128xf32>
    %149 = arith.subf %146, %148 : vector<32x128xf32>
    %150 = arith.addf %149, %37 : vector<32x128xf32>
    %cst_63 = arith.constant 9.900000e-01 : f32
    %151 = vector.broadcast %cst_63 : f32 to vector<32x128xf32>
    %152 = arith.mulf %151, %137 : vector<32x128xf32>
    %cst_64 = arith.constant 2.000000e-03 : f32
    %153 = vector.broadcast %cst_64 : f32 to vector<32x128xf32>
    %154 = arith.mulf %153, %150 : vector<32x128xf32>
    %155 = arith.addf %152, %154 : vector<32x128xf32>
    %cst_65 = arith.constant 3.000000e+01 : f32
    %156 = vector.broadcast %cst_65 : f32 to vector<32x128xf32>
    %157 = arith.cmpf ogt, %150, %156 : vector<32x128xf32>
    %cst_66 = arith.constant -6.500000e+01 : f32
    %158 = vector.broadcast %cst_66 : f32 to vector<32x128xf32>
    %159 = arith.select %157, %158, %150 : vector<32x128xi1>, vector<32x128xf32>
    %cst_67 = arith.constant 8.000000e+00 : f32
    %160 = vector.broadcast %cst_67 : f32 to vector<32x128xf32>
    %161 = arith.addf %155, %160 : vector<32x128xf32>
    %162 = arith.select %157, %161, %155 : vector<32x128xi1>, vector<32x128xf32>
    %cst_68 = arith.constant 1.000000e+00 : f32
    %163 = vector.broadcast %cst_68 : f32 to vector<32x128xf32>
    %164 = arith.addf %140, %163 : vector<32x128xf32>
    %165 = arith.select %157, %164, %140 : vector<32x128xi1>, vector<32x128xf32>
    %166 = arith.mulf %159, %159 : vector<32x128xf32>
    %cst_69 = arith.constant 2.000000e-02 : f32
    %167 = vector.broadcast %cst_69 : f32 to vector<32x128xf32>
    %168 = arith.mulf %167, %166 : vector<32x128xf32>
    %cst_70 = arith.constant 3.500000e+00 : f32
    %169 = vector.broadcast %cst_70 : f32 to vector<32x128xf32>
    %170 = arith.mulf %169, %159 : vector<32x128xf32>
    %171 = arith.addf %168, %170 : vector<32x128xf32>
    %cst_71 = arith.constant 5.000000e-01 : f32
    %172 = vector.broadcast %cst_71 : f32 to vector<32x128xf32>
    %173 = arith.mulf %172, %162 : vector<32x128xf32>
    %174 = arith.subf %171, %173 : vector<32x128xf32>
    %175 = arith.addf %174, %37 : vector<32x128xf32>
    %cst_72 = arith.constant 9.900000e-01 : f32
    %176 = vector.broadcast %cst_72 : f32 to vector<32x128xf32>
    %177 = arith.mulf %176, %162 : vector<32x128xf32>
    %cst_73 = arith.constant 2.000000e-03 : f32
    %178 = vector.broadcast %cst_73 : f32 to vector<32x128xf32>
    %179 = arith.mulf %178, %175 : vector<32x128xf32>
    %180 = arith.addf %177, %179 : vector<32x128xf32>
    %cst_74 = arith.constant 3.000000e+01 : f32
    %181 = vector.broadcast %cst_74 : f32 to vector<32x128xf32>
    %182 = arith.cmpf ogt, %175, %181 : vector<32x128xf32>
    %cst_75 = arith.constant -6.500000e+01 : f32
    %183 = vector.broadcast %cst_75 : f32 to vector<32x128xf32>
    %184 = arith.select %182, %183, %175 : vector<32x128xi1>, vector<32x128xf32>
    %cst_76 = arith.constant 8.000000e+00 : f32
    %185 = vector.broadcast %cst_76 : f32 to vector<32x128xf32>
    %186 = arith.addf %180, %185 : vector<32x128xf32>
    %187 = arith.select %182, %186, %180 : vector<32x128xi1>, vector<32x128xf32>
    %cst_77 = arith.constant 1.000000e+00 : f32
    %188 = vector.broadcast %cst_77 : f32 to vector<32x128xf32>
    %189 = arith.addf %165, %188 : vector<32x128xf32>
    %190 = arith.select %182, %189, %165 : vector<32x128xi1>, vector<32x128xf32>
    %191 = arith.mulf %184, %184 : vector<32x128xf32>
    %cst_78 = arith.constant 2.000000e-02 : f32
    %192 = vector.broadcast %cst_78 : f32 to vector<32x128xf32>
    %193 = arith.mulf %192, %191 : vector<32x128xf32>
    %cst_79 = arith.constant 3.500000e+00 : f32
    %194 = vector.broadcast %cst_79 : f32 to vector<32x128xf32>
    %195 = arith.mulf %194, %184 : vector<32x128xf32>
    %196 = arith.addf %193, %195 : vector<32x128xf32>
    %cst_80 = arith.constant 5.000000e-01 : f32
    %197 = vector.broadcast %cst_80 : f32 to vector<32x128xf32>
    %198 = arith.mulf %197, %187 : vector<32x128xf32>
    %199 = arith.subf %196, %198 : vector<32x128xf32>
    %200 = arith.addf %199, %37 : vector<32x128xf32>
    %cst_81 = arith.constant 9.900000e-01 : f32
    %201 = vector.broadcast %cst_81 : f32 to vector<32x128xf32>
    %202 = arith.mulf %201, %187 : vector<32x128xf32>
    %cst_82 = arith.constant 2.000000e-03 : f32
    %203 = vector.broadcast %cst_82 : f32 to vector<32x128xf32>
    %204 = arith.mulf %203, %200 : vector<32x128xf32>
    %205 = arith.addf %202, %204 : vector<32x128xf32>
    %cst_83 = arith.constant 3.000000e+01 : f32
    %206 = vector.broadcast %cst_83 : f32 to vector<32x128xf32>
    %207 = arith.cmpf ogt, %200, %206 : vector<32x128xf32>
    %cst_84 = arith.constant -6.500000e+01 : f32
    %208 = vector.broadcast %cst_84 : f32 to vector<32x128xf32>
    %209 = arith.select %207, %208, %200 : vector<32x128xi1>, vector<32x128xf32>
    %cst_85 = arith.constant 8.000000e+00 : f32
    %210 = vector.broadcast %cst_85 : f32 to vector<32x128xf32>
    %211 = arith.addf %205, %210 : vector<32x128xf32>
    %212 = arith.select %207, %211, %205 : vector<32x128xi1>, vector<32x128xf32>
    %cst_86 = arith.constant 1.000000e+00 : f32
    %213 = vector.broadcast %cst_86 : f32 to vector<32x128xf32>
    %214 = arith.addf %190, %213 : vector<32x128xf32>
    %215 = arith.select %207, %214, %190 : vector<32x128xi1>, vector<32x128xf32>
    %216 = arith.mulf %209, %209 : vector<32x128xf32>
    %cst_87 = arith.constant 2.000000e-02 : f32
    %217 = vector.broadcast %cst_87 : f32 to vector<32x128xf32>
    %218 = arith.mulf %217, %216 : vector<32x128xf32>
    %cst_88 = arith.constant 3.500000e+00 : f32
    %219 = vector.broadcast %cst_88 : f32 to vector<32x128xf32>
    %220 = arith.mulf %219, %209 : vector<32x128xf32>
    %221 = arith.addf %218, %220 : vector<32x128xf32>
    %cst_89 = arith.constant 5.000000e-01 : f32
    %222 = vector.broadcast %cst_89 : f32 to vector<32x128xf32>
    %223 = arith.mulf %222, %212 : vector<32x128xf32>
    %224 = arith.subf %221, %223 : vector<32x128xf32>
    %225 = arith.addf %224, %37 : vector<32x128xf32>
    %cst_90 = arith.constant 9.900000e-01 : f32
    %226 = vector.broadcast %cst_90 : f32 to vector<32x128xf32>
    %227 = arith.mulf %226, %212 : vector<32x128xf32>
    %cst_91 = arith.constant 2.000000e-03 : f32
    %228 = vector.broadcast %cst_91 : f32 to vector<32x128xf32>
    %229 = arith.mulf %228, %225 : vector<32x128xf32>
    %230 = arith.addf %227, %229 : vector<32x128xf32>
    %cst_92 = arith.constant 3.000000e+01 : f32
    %231 = vector.broadcast %cst_92 : f32 to vector<32x128xf32>
    %232 = arith.cmpf ogt, %225, %231 : vector<32x128xf32>
    %cst_93 = arith.constant -6.500000e+01 : f32
    %233 = vector.broadcast %cst_93 : f32 to vector<32x128xf32>
    %234 = arith.select %232, %233, %225 : vector<32x128xi1>, vector<32x128xf32>
    %cst_94 = arith.constant 8.000000e+00 : f32
    %235 = vector.broadcast %cst_94 : f32 to vector<32x128xf32>
    %236 = arith.addf %230, %235 : vector<32x128xf32>
    %237 = arith.select %232, %236, %230 : vector<32x128xi1>, vector<32x128xf32>
    %cst_95 = arith.constant 1.000000e+00 : f32
    %238 = vector.broadcast %cst_95 : f32 to vector<32x128xf32>
    %239 = arith.addf %215, %238 : vector<32x128xf32>
    %240 = arith.select %232, %239, %215 : vector<32x128xi1>, vector<32x128xf32>
    %241 = arith.mulf %234, %234 : vector<32x128xf32>
    %cst_96 = arith.constant 2.000000e-02 : f32
    %242 = vector.broadcast %cst_96 : f32 to vector<32x128xf32>
    %243 = arith.mulf %242, %241 : vector<32x128xf32>
    %cst_97 = arith.constant 3.500000e+00 : f32
    %244 = vector.broadcast %cst_97 : f32 to vector<32x128xf32>
    %245 = arith.mulf %244, %234 : vector<32x128xf32>
    %246 = arith.addf %243, %245 : vector<32x128xf32>
    %cst_98 = arith.constant 5.000000e-01 : f32
    %247 = vector.broadcast %cst_98 : f32 to vector<32x128xf32>
    %248 = arith.mulf %247, %237 : vector<32x128xf32>
    %249 = arith.subf %246, %248 : vector<32x128xf32>
    %250 = arith.addf %249, %37 : vector<32x128xf32>
    %cst_99 = arith.constant 9.900000e-01 : f32
    %251 = vector.broadcast %cst_99 : f32 to vector<32x128xf32>
    %252 = arith.mulf %251, %237 : vector<32x128xf32>
    %cst_100 = arith.constant 2.000000e-03 : f32
    %253 = vector.broadcast %cst_100 : f32 to vector<32x128xf32>
    %254 = arith.mulf %253, %250 : vector<32x128xf32>
    %255 = arith.addf %252, %254 : vector<32x128xf32>
    %cst_101 = arith.constant 3.000000e+01 : f32
    %256 = vector.broadcast %cst_101 : f32 to vector<32x128xf32>
    %257 = arith.cmpf ogt, %250, %256 : vector<32x128xf32>
    %cst_102 = arith.constant -6.500000e+01 : f32
    %258 = vector.broadcast %cst_102 : f32 to vector<32x128xf32>
    %259 = arith.select %257, %258, %250 : vector<32x128xi1>, vector<32x128xf32>
    %cst_103 = arith.constant 8.000000e+00 : f32
    %260 = vector.broadcast %cst_103 : f32 to vector<32x128xf32>
    %261 = arith.addf %255, %260 : vector<32x128xf32>
    %262 = arith.select %257, %261, %255 : vector<32x128xi1>, vector<32x128xf32>
    %cst_104 = arith.constant 1.000000e+00 : f32
    %263 = vector.broadcast %cst_104 : f32 to vector<32x128xf32>
    %264 = arith.addf %240, %263 : vector<32x128xf32>
    %265 = arith.select %257, %264, %240 : vector<32x128xi1>, vector<32x128xf32>
    %266 = arith.mulf %259, %259 : vector<32x128xf32>
    %cst_105 = arith.constant 2.000000e-02 : f32
    %267 = vector.broadcast %cst_105 : f32 to vector<32x128xf32>
    %268 = arith.mulf %267, %266 : vector<32x128xf32>
    %cst_106 = arith.constant 3.500000e+00 : f32
    %269 = vector.broadcast %cst_106 : f32 to vector<32x128xf32>
    %270 = arith.mulf %269, %259 : vector<32x128xf32>
    %271 = arith.addf %268, %270 : vector<32x128xf32>
    %cst_107 = arith.constant 5.000000e-01 : f32
    %272 = vector.broadcast %cst_107 : f32 to vector<32x128xf32>
    %273 = arith.mulf %272, %262 : vector<32x128xf32>
    %274 = arith.subf %271, %273 : vector<32x128xf32>
    %275 = arith.addf %274, %37 : vector<32x128xf32>
    %cst_108 = arith.constant 9.900000e-01 : f32
    %276 = vector.broadcast %cst_108 : f32 to vector<32x128xf32>
    %277 = arith.mulf %276, %262 : vector<32x128xf32>
    %cst_109 = arith.constant 2.000000e-03 : f32
    %278 = vector.broadcast %cst_109 : f32 to vector<32x128xf32>
    %279 = arith.mulf %278, %275 : vector<32x128xf32>
    %280 = arith.addf %277, %279 : vector<32x128xf32>
    %cst_110 = arith.constant 3.000000e+01 : f32
    %281 = vector.broadcast %cst_110 : f32 to vector<32x128xf32>
    %282 = arith.cmpf ogt, %275, %281 : vector<32x128xf32>
    %cst_111 = arith.constant -6.500000e+01 : f32
    %283 = vector.broadcast %cst_111 : f32 to vector<32x128xf32>
    %284 = arith.select %282, %283, %275 : vector<32x128xi1>, vector<32x128xf32>
    %cst_112 = arith.constant 8.000000e+00 : f32
    %285 = vector.broadcast %cst_112 : f32 to vector<32x128xf32>
    %286 = arith.addf %280, %285 : vector<32x128xf32>
    %287 = arith.select %282, %286, %280 : vector<32x128xi1>, vector<32x128xf32>
    %cst_113 = arith.constant 1.000000e+00 : f32
    %288 = vector.broadcast %cst_113 : f32 to vector<32x128xf32>
    %289 = arith.addf %265, %288 : vector<32x128xf32>
    %290 = arith.select %282, %289, %265 : vector<32x128xi1>, vector<32x128xf32>
    %291 = arith.mulf %284, %284 : vector<32x128xf32>
    %cst_114 = arith.constant 2.000000e-02 : f32
    %292 = vector.broadcast %cst_114 : f32 to vector<32x128xf32>
    %293 = arith.mulf %292, %291 : vector<32x128xf32>
    %cst_115 = arith.constant 3.500000e+00 : f32
    %294 = vector.broadcast %cst_115 : f32 to vector<32x128xf32>
    %295 = arith.mulf %294, %284 : vector<32x128xf32>
    %296 = arith.addf %293, %295 : vector<32x128xf32>
    %cst_116 = arith.constant 5.000000e-01 : f32
    %297 = vector.broadcast %cst_116 : f32 to vector<32x128xf32>
    %298 = arith.mulf %297, %287 : vector<32x128xf32>
    %299 = arith.subf %296, %298 : vector<32x128xf32>
    %300 = arith.addf %299, %37 : vector<32x128xf32>
    %cst_117 = arith.constant 9.900000e-01 : f32
    %301 = vector.broadcast %cst_117 : f32 to vector<32x128xf32>
    %302 = arith.mulf %301, %287 : vector<32x128xf32>
    %cst_118 = arith.constant 2.000000e-03 : f32
    %303 = vector.broadcast %cst_118 : f32 to vector<32x128xf32>
    %304 = arith.mulf %303, %300 : vector<32x128xf32>
    %305 = arith.addf %302, %304 : vector<32x128xf32>
    %cst_119 = arith.constant 3.000000e+01 : f32
    %306 = vector.broadcast %cst_119 : f32 to vector<32x128xf32>
    %307 = arith.cmpf ogt, %300, %306 : vector<32x128xf32>
    %cst_120 = arith.constant -6.500000e+01 : f32
    %308 = vector.broadcast %cst_120 : f32 to vector<32x128xf32>
    %309 = arith.select %307, %308, %300 : vector<32x128xi1>, vector<32x128xf32>
    %cst_121 = arith.constant 8.000000e+00 : f32
    %310 = vector.broadcast %cst_121 : f32 to vector<32x128xf32>
    %311 = arith.addf %305, %310 : vector<32x128xf32>
    %312 = arith.select %307, %311, %305 : vector<32x128xi1>, vector<32x128xf32>
    %cst_122 = arith.constant 1.000000e+00 : f32
    %313 = vector.broadcast %cst_122 : f32 to vector<32x128xf32>
    %314 = arith.addf %290, %313 : vector<32x128xf32>
    %315 = arith.select %307, %314, %290 : vector<32x128xi1>, vector<32x128xf32>
    %316 = arith.mulf %309, %309 : vector<32x128xf32>
    %cst_123 = arith.constant 2.000000e-02 : f32
    %317 = vector.broadcast %cst_123 : f32 to vector<32x128xf32>
    %318 = arith.mulf %317, %316 : vector<32x128xf32>
    %cst_124 = arith.constant 3.500000e+00 : f32
    %319 = vector.broadcast %cst_124 : f32 to vector<32x128xf32>
    %320 = arith.mulf %319, %309 : vector<32x128xf32>
    %321 = arith.addf %318, %320 : vector<32x128xf32>
    %cst_125 = arith.constant 5.000000e-01 : f32
    %322 = vector.broadcast %cst_125 : f32 to vector<32x128xf32>
    %323 = arith.mulf %322, %312 : vector<32x128xf32>
    %324 = arith.subf %321, %323 : vector<32x128xf32>
    %325 = arith.addf %324, %37 : vector<32x128xf32>
    %cst_126 = arith.constant 9.900000e-01 : f32
    %326 = vector.broadcast %cst_126 : f32 to vector<32x128xf32>
    %327 = arith.mulf %326, %312 : vector<32x128xf32>
    %cst_127 = arith.constant 2.000000e-03 : f32
    %328 = vector.broadcast %cst_127 : f32 to vector<32x128xf32>
    %329 = arith.mulf %328, %325 : vector<32x128xf32>
    %330 = arith.addf %327, %329 : vector<32x128xf32>
    %cst_128 = arith.constant 3.000000e+01 : f32
    %331 = vector.broadcast %cst_128 : f32 to vector<32x128xf32>
    %332 = arith.cmpf ogt, %325, %331 : vector<32x128xf32>
    %cst_129 = arith.constant -6.500000e+01 : f32
    %333 = vector.broadcast %cst_129 : f32 to vector<32x128xf32>
    %334 = arith.select %332, %333, %325 : vector<32x128xi1>, vector<32x128xf32>
    %cst_130 = arith.constant 8.000000e+00 : f32
    %335 = vector.broadcast %cst_130 : f32 to vector<32x128xf32>
    %336 = arith.addf %330, %335 : vector<32x128xf32>
    %337 = arith.select %332, %336, %330 : vector<32x128xi1>, vector<32x128xf32>
    %cst_131 = arith.constant 1.000000e+00 : f32
    %338 = vector.broadcast %cst_131 : f32 to vector<32x128xf32>
    %339 = arith.addf %315, %338 : vector<32x128xf32>
    %340 = arith.select %332, %339, %315 : vector<32x128xi1>, vector<32x128xf32>
    %341 = arith.mulf %334, %334 : vector<32x128xf32>
    %cst_132 = arith.constant 2.000000e-02 : f32
    %342 = vector.broadcast %cst_132 : f32 to vector<32x128xf32>
    %343 = arith.mulf %342, %341 : vector<32x128xf32>
    %cst_133 = arith.constant 3.500000e+00 : f32
    %344 = vector.broadcast %cst_133 : f32 to vector<32x128xf32>
    %345 = arith.mulf %344, %334 : vector<32x128xf32>
    %346 = arith.addf %343, %345 : vector<32x128xf32>
    %cst_134 = arith.constant 5.000000e-01 : f32
    %347 = vector.broadcast %cst_134 : f32 to vector<32x128xf32>
    %348 = arith.mulf %347, %337 : vector<32x128xf32>
    %349 = arith.subf %346, %348 : vector<32x128xf32>
    %350 = arith.addf %349, %37 : vector<32x128xf32>
    %cst_135 = arith.constant 9.900000e-01 : f32
    %351 = vector.broadcast %cst_135 : f32 to vector<32x128xf32>
    %352 = arith.mulf %351, %337 : vector<32x128xf32>
    %cst_136 = arith.constant 2.000000e-03 : f32
    %353 = vector.broadcast %cst_136 : f32 to vector<32x128xf32>
    %354 = arith.mulf %353, %350 : vector<32x128xf32>
    %355 = arith.addf %352, %354 : vector<32x128xf32>
    %cst_137 = arith.constant 3.000000e+01 : f32
    %356 = vector.broadcast %cst_137 : f32 to vector<32x128xf32>
    %357 = arith.cmpf ogt, %350, %356 : vector<32x128xf32>
    %cst_138 = arith.constant -6.500000e+01 : f32
    %358 = vector.broadcast %cst_138 : f32 to vector<32x128xf32>
    %359 = arith.select %357, %358, %350 : vector<32x128xi1>, vector<32x128xf32>
    %cst_139 = arith.constant 8.000000e+00 : f32
    %360 = vector.broadcast %cst_139 : f32 to vector<32x128xf32>
    %361 = arith.addf %355, %360 : vector<32x128xf32>
    %362 = arith.select %357, %361, %355 : vector<32x128xi1>, vector<32x128xf32>
    %cst_140 = arith.constant 1.000000e+00 : f32
    %363 = vector.broadcast %cst_140 : f32 to vector<32x128xf32>
    %364 = arith.addf %340, %363 : vector<32x128xf32>
    %365 = arith.select %357, %364, %340 : vector<32x128xi1>, vector<32x128xf32>
    %366 = arith.mulf %359, %359 : vector<32x128xf32>
    %cst_141 = arith.constant 2.000000e-02 : f32
    %367 = vector.broadcast %cst_141 : f32 to vector<32x128xf32>
    %368 = arith.mulf %367, %366 : vector<32x128xf32>
    %cst_142 = arith.constant 3.500000e+00 : f32
    %369 = vector.broadcast %cst_142 : f32 to vector<32x128xf32>
    %370 = arith.mulf %369, %359 : vector<32x128xf32>
    %371 = arith.addf %368, %370 : vector<32x128xf32>
    %cst_143 = arith.constant 5.000000e-01 : f32
    %372 = vector.broadcast %cst_143 : f32 to vector<32x128xf32>
    %373 = arith.mulf %372, %362 : vector<32x128xf32>
    %374 = arith.subf %371, %373 : vector<32x128xf32>
    %375 = arith.addf %374, %37 : vector<32x128xf32>
    %cst_144 = arith.constant 9.900000e-01 : f32
    %376 = vector.broadcast %cst_144 : f32 to vector<32x128xf32>
    %377 = arith.mulf %376, %362 : vector<32x128xf32>
    %cst_145 = arith.constant 2.000000e-03 : f32
    %378 = vector.broadcast %cst_145 : f32 to vector<32x128xf32>
    %379 = arith.mulf %378, %375 : vector<32x128xf32>
    %380 = arith.addf %377, %379 : vector<32x128xf32>
    %cst_146 = arith.constant 3.000000e+01 : f32
    %381 = vector.broadcast %cst_146 : f32 to vector<32x128xf32>
    %382 = arith.cmpf ogt, %375, %381 : vector<32x128xf32>
    %cst_147 = arith.constant -6.500000e+01 : f32
    %383 = vector.broadcast %cst_147 : f32 to vector<32x128xf32>
    %384 = arith.select %382, %383, %375 : vector<32x128xi1>, vector<32x128xf32>
    %cst_148 = arith.constant 8.000000e+00 : f32
    %385 = vector.broadcast %cst_148 : f32 to vector<32x128xf32>
    %386 = arith.addf %380, %385 : vector<32x128xf32>
    %387 = arith.select %382, %386, %380 : vector<32x128xi1>, vector<32x128xf32>
    %cst_149 = arith.constant 1.000000e+00 : f32
    %388 = vector.broadcast %cst_149 : f32 to vector<32x128xf32>
    %389 = arith.addf %365, %388 : vector<32x128xf32>
    %390 = arith.select %382, %389, %365 : vector<32x128xi1>, vector<32x128xf32>
    %391 = arith.mulf %384, %384 : vector<32x128xf32>
    %cst_150 = arith.constant 2.000000e-02 : f32
    %392 = vector.broadcast %cst_150 : f32 to vector<32x128xf32>
    %393 = arith.mulf %392, %391 : vector<32x128xf32>
    %cst_151 = arith.constant 3.500000e+00 : f32
    %394 = vector.broadcast %cst_151 : f32 to vector<32x128xf32>
    %395 = arith.mulf %394, %384 : vector<32x128xf32>
    %396 = arith.addf %393, %395 : vector<32x128xf32>
    %cst_152 = arith.constant 5.000000e-01 : f32
    %397 = vector.broadcast %cst_152 : f32 to vector<32x128xf32>
    %398 = arith.mulf %397, %387 : vector<32x128xf32>
    %399 = arith.subf %396, %398 : vector<32x128xf32>
    %400 = arith.addf %399, %37 : vector<32x128xf32>
    %cst_153 = arith.constant 9.900000e-01 : f32
    %401 = vector.broadcast %cst_153 : f32 to vector<32x128xf32>
    %402 = arith.mulf %401, %387 : vector<32x128xf32>
    %cst_154 = arith.constant 2.000000e-03 : f32
    %403 = vector.broadcast %cst_154 : f32 to vector<32x128xf32>
    %404 = arith.mulf %403, %400 : vector<32x128xf32>
    %405 = arith.addf %402, %404 : vector<32x128xf32>
    %cst_155 = arith.constant 3.000000e+01 : f32
    %406 = vector.broadcast %cst_155 : f32 to vector<32x128xf32>
    %407 = arith.cmpf ogt, %400, %406 : vector<32x128xf32>
    %cst_156 = arith.constant -6.500000e+01 : f32
    %408 = vector.broadcast %cst_156 : f32 to vector<32x128xf32>
    %409 = arith.select %407, %408, %400 : vector<32x128xi1>, vector<32x128xf32>
    %cst_157 = arith.constant 8.000000e+00 : f32
    %410 = vector.broadcast %cst_157 : f32 to vector<32x128xf32>
    %411 = arith.addf %405, %410 : vector<32x128xf32>
    %412 = arith.select %407, %411, %405 : vector<32x128xi1>, vector<32x128xf32>
    %cst_158 = arith.constant 1.000000e+00 : f32
    %413 = vector.broadcast %cst_158 : f32 to vector<32x128xf32>
    %414 = arith.addf %390, %413 : vector<32x128xf32>
    %415 = arith.select %407, %414, %390 : vector<32x128xi1>, vector<32x128xf32>
    %416 = arith.mulf %409, %409 : vector<32x128xf32>
    %cst_159 = arith.constant 2.000000e-02 : f32
    %417 = vector.broadcast %cst_159 : f32 to vector<32x128xf32>
    %418 = arith.mulf %417, %416 : vector<32x128xf32>
    %cst_160 = arith.constant 3.500000e+00 : f32
    %419 = vector.broadcast %cst_160 : f32 to vector<32x128xf32>
    %420 = arith.mulf %419, %409 : vector<32x128xf32>
    %421 = arith.addf %418, %420 : vector<32x128xf32>
    %cst_161 = arith.constant 5.000000e-01 : f32
    %422 = vector.broadcast %cst_161 : f32 to vector<32x128xf32>
    %423 = arith.mulf %422, %412 : vector<32x128xf32>
    %424 = arith.subf %421, %423 : vector<32x128xf32>
    %425 = arith.addf %424, %37 : vector<32x128xf32>
    %cst_162 = arith.constant 3.000000e+01 : f32
    %426 = vector.broadcast %cst_162 : f32 to vector<32x128xf32>
    %427 = arith.cmpf ogt, %425, %426 : vector<32x128xf32>
    %cst_163 = arith.constant 1.000000e+00 : f32
    %428 = vector.broadcast %cst_163 : f32 to vector<32x128xf32>
    %429 = arith.addf %415, %428 : vector<32x128xf32>
    %430 = arith.select %427, %429, %415 : vector<32x128xi1>, vector<32x128xf32>
    %cst_164 = arith.constant 6.250000e-02 : f32
    %431 = vector.broadcast %cst_164 : f32 to vector<32x128xf32>
    %432 = arith.mulf %430, %431 : vector<32x128xf32>
    %c0_165 = arith.constant 0 : index
    %c0_166 = arith.constant 0 : index
    %433 = vector.load %arg5[%c0_165, %c0_166] : memref<32x128xf32, #tpu.memory_space<vmem>>, vector<32x128xf32>
    tpu.vector_store %arg5[%c0_165, %c0_166], %432 {strides = array<i32>} : memref<32x128xf32, #tpu.memory_space<vmem>>, vector<32x128xf32>,
    return
  }
  func.func @transform_0(%arg0: i32) -> i32 {
    %c0_i32 = arith.constant 0 : i32
    %c0_i32_0 = arith.constant 0 : i32
    return %c0_i32 : i32
  }
  func.func @transform_1(%arg0: i32) -> (i32, i32) {
    %c0_i32 = arith.constant 0 : i32
    %c0_i32_0 = arith.constant 0 : i32
    return %arg0, %c0_i32 : i32, i32
  }
  func.func @transform_2(%arg0: i32) -> (i32, i32) {
    %c0_i32 = arith.constant 0 : i32
    %c0_i32_0 = arith.constant 0 : i32
    %c0_i32_1 = arith.constant 0 : i32
    return %c0_i32, %c0_i32_0 : i32, i32
  }
  func.func @transform_3(%arg0: i32) -> (i32, i32) {
    %c0_i32 = arith.constant 0 : i32
    %c0_i32_0 = arith.constant 0 : i32
    return %arg0, %c0_i32 : i32, i32
  }
  func.func @transform_4(%arg0: i32) -> (i32, i32) {
    %c0_i32 = arith.constant 0 : i32
    %c0_i32_0 = arith.constant 0 : i32
    return %arg0, %c0_i32 : i32, i32
  }
  func.func @transform_5(%arg0: i32) -> (i32, i32) {
    %c0_i32 = arith.constant 0 : i32
    %c0_i32_0 = arith.constant 0 : i32
    return %arg0, %c0_i32 : i32, i32
  }
}

</mosaic_0001>

<llo_original>
// kernel: tpu_custom_call.1
$region0: #{tpu_custom_call.1}
  #allocation0 [shape = 'u32[]', space=smem, size = 0x4, offset = 0x4, fixed_abs, tag = 'smem constant byte address 0x4 - core index']
  #allocation1 [shape = 'u32[72,128]{1,0:T(1,128)}', space=vmem, size = 0x9000, scoped, tag = 'internal scratch']
  #allocation2 [shape = 'f32[1]{0:T(128)S(6)}', space=smem, size = 0x200, scoped, tag = 'scoped memory for tpu_custom_call.1']
  %s0 = inlined_call_operand.<no memory space> [shape: f32[1], index: 0, kind: input, shape index: {}]
  %s1 = inlined_call_operand.hbm [shape: f32[32,512], index: 1, kind: input, shape index: {}]
  %s2 = inlined_call_operand.hbm [shape: f32[1,512], index: 2, kind: input, shape index: {}]
  %s3 = inlined_call_operand.hbm [shape: f32[32,128], index: 3, kind: input, shape index: {}]
  %s4 = inlined_call_operand.hbm [shape: f32[32,128], index: 4, kind: output, shape index: {0}]
  %s5 = inlined_call_operand.hbm [shape: f32[32,128], index: 5, kind: output, shape index: {1}]
  %6 = xla_tuple %s4, %s5
  %s7 = sld [smem:[#allocation0]]
  $region46: #{tpu_custom_call.1} parent=0
    _
  %s9 = ssub.s32 1, %s7
  %s10 = scalar_select 0, %s9, %s7
  %11 = sst [smem:[#allocation2]] %s0
  $region1: #{tpu_custom_call.1} parent=0
    #allocation3 [shape = 'u8[65536]{0}', space=vmem, size = 0x10000, scoped, tag = 'input window, operand 1, single buffered']
    #allocation4 [shape = 's32[1]{0}', space=sflag, size = 0x4, scoped, tag = 'scoped memory for tpu_custom_call.1']
    #allocation5 [shape = 's32[1]{0}', space=sflag, size = 0x4, scoped, tag = 'scoped memory for tpu_custom_call.1']
    #allocation6 [shape = 'u8[2048]{0}', space=vmem, size = 0x800, scoped, tag = 'input window, operand 2, single buffered']
    #allocation7 [shape = 's32[1]{0}', space=sflag, size = 0x4, scoped, tag = 'scoped memory for tpu_custom_call.1']
    #allocation8 [shape = 'u8[16384]{0}', space=vmem, size = 0x4000, scoped, tag = 'input window, operand 3, single buffered']
    #allocation9 [shape = 'u8[16384]{0}', space=vmem, size = 0x4000, scoped, tag = 'output window, operand 0, single buffered']
    #allocation10 [shape = 'u8[16384]{0}', space=vmem, size = 0x4000, scoped, tag = 'output window, operand 1, single buffered']
    #allocation11 [shape = 's32[1]{0}', space=sflag, size = 0x4, scoped, tag = 'scoped memory for tpu_custom_call.1']
    %12 = vsyncpa [#allocation4], 0
    %13 = vsyncpa [#allocation7], 0
    %14 = vsyncpa [#allocation5], 0
    %15 = vsyncpa [#allocation11], 0
    // Predicated region
    $region2: #{tpu_custom_call.1} parent=1 // pred_check
      _
    $region3: #{tpu_custom_call.1} parent=1 // pred_check_branch
      %17 = sbr.rel (0) target = $region5
    $region4: #{tpu_custom_call.1} parent=1 // pred_region
      _
    $region5: #{tpu_custom_call.1} parent=1 // pred_fallthru
      _
    // Predicated region
    $region6: #{tpu_custom_call.1} parent=1 // pred_check
      _
    $region7: #{tpu_custom_call.1} parent=1 // pred_check_branch
      %19 = sbr.rel (0) target = $region9
    $region8: #{tpu_custom_call.1} parent=1 // pred_region
      %21 = vsyncadd [#allocation4], 0
      %s22 = sshll.u32 %s1, 4
      %s23 = int_to_ptr.hbm [resolvable:$true] %s22
      %s24 = sshll.u32 [#allocation3], 4
      %s25 = int_to_ptr.vmem [resolvable:$true] %s24
      %30 = dma.hbm_to_vmem [thread:$0]  %s23, 2048, %s25, [#allocation4], 512, 512, 32
    $region9: #{tpu_custom_call.1} parent=1 // pred_fallthru
      _
    // Predicated region
    $region10: #{tpu_custom_call.1} parent=1 // pred_check
      _
    $region11: #{tpu_custom_call.1} parent=1 // pred_check_branch
      %32 = sbr.rel (0) target = $region13
    $region12: #{tpu_custom_call.1} parent=1 // pred_region
      %34 = vsyncadd [#allocation7], 0
      %s36 = sshll.u32 %s2, 4
      %s37 = int_to_ptr.hbm [resolvable:$true] %s36
      %s38 = sshll.u32 [#allocation6], 4
      %s39 = int_to_ptr.vmem [resolvable:$true] %s38
      %41 = dma.hbm_to_vmem [thread:$0]  %s37, 64, %s39, [#allocation7]
    $region13: #{tpu_custom_call.1} parent=1 // pred_fallthru
      _
    // Predicated region
    $region14: #{tpu_custom_call.1} parent=1 // pred_check
      _
    $region15: #{tpu_custom_call.1} parent=1 // pred_check_branch
      %43 = sbr.rel (0) target = $region17
    $region16: #{tpu_custom_call.1} parent=1 // pred_region
      %45 = vsyncadd [#allocation7], 0
      %s46 = sshll.u32 %s3, 4
      %s47 = int_to_ptr.hbm [resolvable:$true] %s46
      %s48 = sshll.u32 [#allocation8], 4
      %s49 = int_to_ptr.vmem [resolvable:$true] %s48
      %54 = dma.hbm_to_vmem [thread:$0]  %s47, 512, %s49, [#allocation7], 128, 128, 8
    $region17: #{tpu_custom_call.1} parent=1 // pred_fallthru
      _
    // Predicated region
    $region18: #{tpu_custom_call.1} parent=1 // pred_check
      _
    $region19: #{tpu_custom_call.1} parent=1 // pred_check_branch
      %56 = sbr.rel (0) target = $region21
    $region20: #{tpu_custom_call.1} parent=1 // pred_region
      %58 = dma.done [#allocation4], 2048
    $region21: #{tpu_custom_call.1} parent=1 // pred_fallthru
      _
    // Predicated region
    $region22: #{tpu_custom_call.1} parent=1 // pred_check
      _
    $region23: #{tpu_custom_call.1} parent=1 // pred_check_branch
      %60 = sbr.rel (0) target = $region25
    $region24: #{tpu_custom_call.1} parent=1 // pred_region
      %62 = dma.done [#allocation7], 64
    $region25: #{tpu_custom_call.1} parent=1 // pred_fallthru
      _
    // Predicated region
    $region26: #{tpu_custom_call.1} parent=1 // pred_check
      _
    $region27: #{tpu_custom_call.1} parent=1 // pred_check_branch
      %64 = sbr.rel (0) target = $region29
    $region28: #{tpu_custom_call.1} parent=1 // pred_region
      %66 = dma.done [#allocation7], 512
    $region29: #{tpu_custom_call.1} parent=1 // pred_fallthru
      _
    %s67 = sld [smem:[#allocation2]]
    %v68 = vld [vmem:[#allocation6] sm:$0x1]
    %v69 = vld [vmem:[#allocation6 + $0x1] sm:$0x1]
    %v70 = vld [vmem:[#allocation6 + $0x2] sm:$0x1]
    %v71 = vld [vmem:[#allocation6 + $0x3] sm:$0x1]
    %v72 = vld [vmem:[#allocation3] sm:$0xff]
    %v73 = vld [vmem:[#allocation3 + $0x20] sm:$0xff]
    %v74 = vld [vmem:[#allocation3 + $0x40] sm:$0xff]
    %v75 = vld [vmem:[#allocation3 + $0x60] sm:$0xff]
    %v77 = vperm.slane %v68, 0
    %v79 = vmul.f32 %v72, %v77
    %v80 = vmul.f32 %v73, %v77
    %v81 = vmul.f32 %v74, %v77
    %v82 = vmul.f32 %v75, %v77
    %v83 = vld [vmem:[#allocation3 + $0x8] sm:$0xff]
    %v84 = vld [vmem:[#allocation3 + $0x28] sm:$0xff]
    %v85 = vld [vmem:[#allocation3 + $0x48] sm:$0xff]
    %v86 = vld [vmem:[#allocation3 + $0x68] sm:$0xff]
    %v88 = vperm.slane %v69, 0
    %v90 = vmul.f32 %v83, %v88
    %v91 = vmul.f32 %v84, %v88
    %v92 = vmul.f32 %v85, %v88
    %v93 = vmul.f32 %v86, %v88
    %v94 = vadd.f32 %v79, %v90
    %v95 = vadd.f32 %v80, %v91
    %v96 = vadd.f32 %v81, %v92
    %v97 = vadd.f32 %v82, %v93
    %v98 = vld [vmem:[#allocation3 + $0x10] sm:$0xff]
    %v99 = vld [vmem:[#allocation3 + $0x30] sm:$0xff]
    %v100 = vld [vmem:[#allocation3 + $0x50] sm:$0xff]
    %v101 = vld [vmem:[#allocation3 + $0x70] sm:$0xff]
    %v103 = vperm.slane %v70, 0
    %v105 = vmul.f32 %v98, %v103
    %v106 = vmul.f32 %v99, %v103
    %v107 = vmul.f32 %v100, %v103
    %v108 = vmul.f32 %v101, %v103
    %v109 = vadd.f32 %v94, %v105
    %v110 = vadd.f32 %v95, %v106
    %v111 = vadd.f32 %v96, %v107
    %v112 = vadd.f32 %v97, %v108
    %v113 = vld [vmem:[#allocation3 + $0x18] sm:$0xff]
    %v114 = vld [vmem:[#allocation3 + $0x38] sm:$0xff]
    %v115 = vld [vmem:[#allocation3 + $0x58] sm:$0xff]
    %v116 = vld [vmem:[#allocation3 + $0x78] sm:$0xff]
    %v118 = vperm.slane %v71, 0
    %v120 = vmul.f32 %v113, %v118
    %v121 = vmul.f32 %v114, %v118
    %v122 = vmul.f32 %v115, %v118
    %v123 = vmul.f32 %v116, %v118
    %v124 = vadd.f32 %v109, %v120
    %v125 = vadd.f32 %v110, %v121
    %v126 = vadd.f32 %v111, %v122
    %v127 = vadd.f32 %v112, %v123
    %v128 = vtanh.pop %v124
    %v129 = vtanh.pop %v125
    %v130 = vtanh.pop %v126
    %v131 = vtanh.pop %v127
    %v132 = vmax.f32 %v128, 0.0
    %v133 = vmax.f32 %v129, 0.0
    %v134 = vmax.f32 %v130, 0.0
    %v135 = vmax.f32 %v131, 0.0
    %v136 = vld [vmem:[#allocation8] sm:$0xff]
    %v137 = vld [vmem:[#allocation8 + $0x8] sm:$0xff]
    %v138 = vld [vmem:[#allocation8 + $0x10] sm:$0xff]
    %v139 = vld [vmem:[#allocation8 + $0x18] sm:$0xff]
    %v140 = vsub.f32 %v136, %v132
    %v141 = vsub.f32 %v137, %v133
    %v142 = vsub.f32 %v138, %v134
    %v143 = vsub.f32 %v139, %v135
    %v144 = vstv %s67
    %v145 = vmul.f32 %v144, %v140
    %v146 = vmul.f32 %v144, %v141
    %v147 = vmul.f32 %v144, %v142
    %v148 = vmul.f32 %v144, %v143
    %v149 = vsub.f32 %v136, %v145
    %v150 = vsub.f32 %v137, %v146
    %v151 = vsub.f32 %v138, %v147
    %v152 = vsub.f32 %v139, %v148
    %v153 = vmax.f32 %v149, 0.0
    %v154 = vmax.f32 %v150, 0.0
    %v155 = vmax.f32 %v151, 0.0
    %v156 = vmax.f32 %v152, 0.0
    %157 = vst [vmem:[#allocation10] sm:$0xff] %v153
    %158 = vst [vmem:[#allocation10 + $0x8] sm:$0xff] %v154
    %159 = vst [vmem:[#allocation10 + $0x10] sm:$0xff] %v155
    %160 = vst [vmem:[#allocation10 + $0x18] sm:$0xff] %v156
    %v161 = vmul.f32 %v153, 20.0
    %v162 = vmul.f32 %v154, 20.0
    %v163 = vmul.f32 %v155, 20.0
    %v164 = vmul.f32 %v156, 20.0
    %v165 = vround.ne.pseudo %v161
    %v166 = vround.ne.pseudo %v162
    %v167 = vround.ne.pseudo %v163
    %v168 = vround.ne.pseudo %v164
    %v169 = vmul.f32 %v165, 0.5
    %v170 = vmul.f32 %v166, 0.5
    %v171 = vmul.f32 %v167, 0.5
    %v172 = vmul.f32 %v168, 0.5
    %v173 = vadd.f32 %v169, 70.0
    %v174 = vadd.f32 %v170, 70.0
    %v175 = vadd.f32 %v171, 70.0
    %v176 = vadd.f32 %v172, 70.0
    %v177 = vadd.f32 %v173, -140.0
    %v178 = vadd.f32 %v174, -140.0
    %v179 = vadd.f32 %v175, -140.0
    %v180 = vadd.f32 %v176, -140.0
    %v181 = vmul.f32 %v177, 0.002
    %v182 = vmul.f32 %v178, 0.002
    %v183 = vmul.f32 %v179, 0.002
    %v184 = vmul.f32 %v180, 0.002
    %v185 = vadd.f32 %v181, -13.860001
    %v186 = vadd.f32 %v182, -13.860001
    %v187 = vadd.f32 %v183, -13.860001
    %v188 = vadd.f32 %v184, -13.860001
    %vm189 = vcmp.gt.f32.partialorder %v177, 30.0
    %vm190 = vcmp.gt.f32.partialorder %v178, 30.0
    %vm191 = vcmp.gt.f32.partialorder %v179, 30.0
    %vm192 = vcmp.gt.f32.partialorder %v180, 30.0
    %v193 = vsel %vm189, -65.0, %v177
    %v194 = vsel %vm190, -65.0, %v178
    %v195 = vsel %vm191, -65.0, %v179
    %v196 = vsel %vm192, -65.0, %v180
    %v197 = vadd.f32 %v185, 8.0
    %v198 = vadd.f32 %v186, 8.0
    %v199 = vadd.f32 %v187, 8.0
    %v200 = vadd.f32 %v188, 8.0
    %v201 = vsel %vm189, %v197, %v185
    %v202 = vsel %vm190, %v198, %v186
    %v203 = vsel %vm191, %v199, %v187
    %v204 = vsel %vm192, %v200, %v188
    %v205 = vsel %vm189, 1.0, 0.0
    %v206 = vsel %vm190, 1.0, 0.0
    %v207 = vsel %vm191, 1.0, 0.0
    %v208 = vsel %vm192, 1.0, 0.0
    %v209 = vmul.f32 %v193, %v193
    %v210 = vmul.f32 %v194, %v194
    %v211 = vmul.f32 %v195, %v195
    %v212 = vmul.f32 %v196, %v196
    %v213 = vmul.f32 %v209, 0.02
    %v214 = vmul.f32 %v210, 0.02
    %v215 = vmul.f32 %v211, 0.02
    %v216 = vmul.f32 %v212, 0.02
    %v217 = vmul.f32 %v193, 3.5
    %v218 = vmul.f32 %v194, 3.5
    %v219 = vmul.f32 %v195, 3.5
    %v220 = vmul.f32 %v196, 3.5
    %v221 = vadd.f32 %v213, %v217
    %v222 = vadd.f32 %v214, %v218
    %v223 = vadd.f32 %v215, %v219
    %v224 = vadd.f32 %v216, %v220
    %v225 = vmul.f32 %v201, 0.5
    %v226 = vmul.f32 %v202, 0.5
    %v227 = vmul.f32 %v203, 0.5
    %v228 = vmul.f32 %v204, 0.5
    %v229 = vsub.f32 %v221, %v225
    %v230 = vsub.f32 %v222, %v226
    %v231 = vsub.f32 %v223, %v227
    %v232 = vsub.f32 %v224, %v228
    %v233 = vadd.f32 %v229, %v173
    %v234 = vadd.f32 %v230, %v174
    %v235 = vadd.f32 %v231, %v175
    %v236 = vadd.f32 %v232, %v176
    %v237 = vmul.f32 %v201, 0.99
    %v238 = vmul.f32 %v202, 0.99
    %v239 = vmul.f32 %v203, 0.99
    %v240 = vmul.f32 %v204, 0.99
    %v241 = vmul.f32 %v233, 0.002
    %v242 = vmul.f32 %v234, 0.002
    %v243 = vmul.f32 %v235, 0.002
    %v244 = vmul.f32 %v236, 0.002
    %v245 = vadd.f32 %v237, %v241
    %v246 = vadd.f32 %v238, %v242
    %v247 = vadd.f32 %v239, %v243
    %v248 = vadd.f32 %v240, %v244
    %vm249 = vcmp.gt.f32.partialorder %v233, 30.0
    %vm250 = vcmp.gt.f32.partialorder %v234, 30.0
    %vm251 = vcmp.gt.f32.partialorder %v235, 30.0
    %vm252 = vcmp.gt.f32.partialorder %v236, 30.0
    %v253 = vsel %vm249, -65.0, %v233
    %v254 = vsel %vm250, -65.0, %v234
    %v255 = vsel %vm251, -65.0, %v235
    %v256 = vsel %vm252, -65.0, %v236
    %v257 = vadd.f32 %v245, 8.0
    %v258 = vadd.f32 %v246, 8.0
    %v259 = vadd.f32 %v247, 8.0
    %v260 = vadd.f32 %v248, 8.0
    %v261 = vsel %vm249, %v257, %v245
    %v262 = vsel %vm250, %v258, %v246
    %v263 = vsel %vm251, %v259, %v247
    %v264 = vsel %vm252, %v260, %v248
    %v265 = vadd.f32 %v205, 1.0
    %v266 = vadd.f32 %v206, 1.0
    %v267 = vadd.f32 %v207, 1.0
    %v268 = vadd.f32 %v208, 1.0
    %v269 = vsel %vm249, %v265, %v205
    %v270 = vsel %vm250, %v266, %v206
    %v271 = vsel %vm251, %v267, %v207
    %v272 = vsel %vm252, %v268, %v208
    %v273 = vmul.f32 %v253, %v253
    %v274 = vmul.f32 %v254, %v254
    %v275 = vmul.f32 %v255, %v255
    %v276 = vmul.f32 %v256, %v256
    %v277 = vmul.f32 %v273, 0.02
    %v278 = vmul.f32 %v274, 0.02
    %v279 = vmul.f32 %v275, 0.02
    %v280 = vmul.f32 %v276, 0.02
    %v281 = vmul.f32 %v253, 3.5
    %v282 = vmul.f32 %v254, 3.5
    %v283 = vmul.f32 %v255, 3.5
    %v284 = vmul.f32 %v256, 3.5
    %v285 = vadd.f32 %v277, %v281
    %v286 = vadd.f32 %v278, %v282
    %v287 = vadd.f32 %v279, %v283
    %v288 = vadd.f32 %v280, %v284
    %v289 = vmul.f32 %v261, 0.5
    %v290 = vmul.f32 %v262, 0.5
    %v291 = vmul.f32 %v263, 0.5
    %v292 = vmul.f32 %v264, 0.5
    %v293 = vsub.f32 %v285, %v289
    %v294 = vsub.f32 %v286, %v290
    %v295 = vsub.f32 %v287, %v291
    %v296 = vsub.f32 %v288, %v292
    %v297 = vadd.f32 %v293, %v173
    %v298 = vadd.f32 %v294, %v174
    %v299 = vadd.f32 %v295, %v175
    %v300 = vadd.f32 %v296, %v176
    %v301 = vmul.f32 %v261, 0.99
    %v302 = vmul.f32 %v262, 0.99
    %v303 = vmul.f32 %v263, 0.99
    %v304 = vmul.f32 %v264, 0.99
    %v305 = vmul.f32 %v297, 0.002
    %v306 = vmul.f32 %v298, 0.002
    %v307 = vmul.f32 %v299, 0.002
    %v308 = vmul.f32 %v300, 0.002
    %v309 = vadd.f32 %v301, %v305
    %v310 = vadd.f32 %v302, %v306
    %v311 = vadd.f32 %v303, %v307
    %v312 = vadd.f32 %v304, %v308
    %vm313 = vcmp.gt.f32.partialorder %v297, 30.0
    %vm314 = vcmp.gt.f32.partialorder %v298, 30.0
    %vm315 = vcmp.gt.f32.partialorder %v299, 30.0
    %vm316 = vcmp.gt.f32.partialorder %v300, 30.0
    %v317 = vsel %vm313, -65.0, %v297
    %v318 = vsel %vm314, -65.0, %v298
    %v319 = vsel %vm315, -65.0, %v299
    %v320 = vsel %vm316, -65.0, %v300
    %v321 = vadd.f32 %v309, 8.0
    %v322 = vadd.f32 %v310, 8.0
    %v323 = vadd.f32 %v311, 8.0
    %v324 = vadd.f32 %v312, 8.0
    %v325 = vsel %vm313, %v321, %v309
    %v326 = vsel %vm314, %v322, %v310
    %v327 = vsel %vm315, %v323, %v311
    %v328 = vsel %vm316, %v324, %v312
    %v329 = vadd.f32 %v269, 1.0
    %v330 = vadd.f32 %v270, 1.0
    %v331 = vadd.f32 %v271, 1.0
    %v332 = vadd.f32 %v272, 1.0
    %v333 = vsel %vm313, %v329, %v269
    %v334 = vsel %vm314, %v330, %v270
    %v335 = vsel %vm315, %v331, %v271
    %v336 = vsel %vm316, %v332, %v272
    %v337 = vmul.f32 %v317, %v317
    %v338 = vmul.f32 %v318, %v318
    %v339 = vmul.f32 %v319, %v319
    %v340 = vmul.f32 %v320, %v320
    %v341 = vmul.f32 %v337, 0.02
    %v342 = vmul.f32 %v338, 0.02
    %v343 = vmul.f32 %v339, 0.02
    %v344 = vmul.f32 %v340, 0.02
    %v345 = vmul.f32 %v317, 3.5
    %v346 = vmul.f32 %v318, 3.5
    %v347 = vmul.f32 %v319, 3.5
    %v348 = vmul.f32 %v320, 3.5
    %v349 = vadd.f32 %v341, %v345
    %v350 = vadd.f32 %v342, %v346
    %v351 = vadd.f32 %v343, %v347
    %v352 = vadd.f32 %v344, %v348
    %v353 = vmul.f32 %v325, 0.5
    %v354 = vmul.f32 %v326, 0.5
    %v355 = vmul.f32 %v327, 0.5
    %v356 = vmul.f32 %v328, 0.5
    %v357 = vsub.f32 %v349, %v353
    %v358 = vsub.f32 %v350, %v354
    %v359 = vsub.f32 %v351, %v355
    %v360 = vsub.f32 %v352, %v356
    %v361 = vadd.f32 %v357, %v173
    %v362 = vadd.f32 %v358, %v174
    %v363 = vadd.f32 %v359, %v175
    %v364 = vadd.f32 %v360, %v176
    %v365 = vmul.f32 %v325, 0.99
    %v366 = vmul.f32 %v326, 0.99
    %v367 = vmul.f32 %v327, 0.99
    %v368 = vmul.f32 %v328, 0.99
    %v369 = vmul.f32 %v361, 0.002
    %v370 = vmul.f32 %v362, 0.002
    %v371 = vmul.f32 %v363, 0.002
    %v372 = vmul.f32 %v364, 0.002
    %v373 = vadd.f32 %v365, %v369
    %v374 = vadd.f32 %v366, %v370
    %v375 = vadd.f32 %v367, %v371
    %v376 = vadd.f32 %v368, %v372
    %vm377 = vcmp.gt.f32.partialorder %v361, 30.0
    %vm378 = vcmp.gt.f32.partialorder %v362, 30.0
    %vm379 = vcmp.gt.f32.partialorder %v363, 30.0
    %vm380 = vcmp.gt.f32.partialorder %v364, 30.0
    %v381 = vsel %vm377, -65.0, %v361
    %v382 = vsel %vm378, -65.0, %v362
    %v383 = vsel %vm379, -65.0, %v363
    %v384 = vsel %vm380, -65.0, %v364
    %v385 = vadd.f32 %v373, 8.0
    %v386 = vadd.f32 %v374, 8.0
    %v387 = vadd.f32 %v375, 8.0
    %v388 = vadd.f32 %v376, 8.0
    %v389 = vsel %vm377, %v385, %v373
    %v390 = vsel %vm378, %v386, %v374
    %v391 = vsel %vm379, %v387, %v375
    %v392 = vsel %vm380, %v388, %v376
    %v393 = vadd.f32 %v333, 1.0
    %v394 = vadd.f32 %v334, 1.0
    %v395 = vadd.f32 %v335, 1.0
    %v396 = vadd.f32 %v336, 1.0
    %v397 = vsel %vm377, %v393, %v333
    %v398 = vsel %vm378, %v394, %v334
    %v399 = vsel %vm379, %v395, %v335
    %v400 = vsel %vm380, %v396, %v336
    %v401 = vmul.f32 %v381, %v381
    %v402 = vmul.f32 %v382, %v382
    %v403 = vmul.f32 %v383, %v383
    %v404 = vmul.f32 %v384, %v384
    %v405 = vmul.f32 %v401, 0.02
    %v406 = vmul.f32 %v402, 0.02
    %v407 = vmul.f32 %v403, 0.02
    %v408 = vmul.f32 %v404, 0.02
    %v409 = vmul.f32 %v381, 3.5
    %v410 = vmul.f32 %v382, 3.5
    %v411 = vmul.f32 %v383, 3.5
    %v412 = vmul.f32 %v384, 3.5
    %v413 = vadd.f32 %v405, %v409
    %v414 = vadd.f32 %v406, %v410
    %v415 = vadd.f32 %v407, %v411
    %v416 = vadd.f32 %v408, %v412
    %v417 = vmul.f32 %v389, 0.5
    %v418 = vmul.f32 %v390, 0.5
    %v419 = vmul.f32 %v391, 0.5
    %v420 = vmul.f32 %v392, 0.5
    %v421 = vsub.f32 %v413, %v417
    %v422 = vsub.f32 %v414, %v418
    %v423 = vsub.f32 %v415, %v419
    %v424 = vsub.f32 %v416, %v420
    %v425 = vadd.f32 %v421, %v173
    %v426 = vadd.f32 %v422, %v174
    %v427 = vadd.f32 %v423, %v175
    %v428 = vadd.f32 %v424, %v176
    %v429 = vmul.f32 %v389, 0.99
    %v430 = vmul.f32 %v390, 0.99
    %v431 = vmul.f32 %v391, 0.99
    %v432 = vmul.f32 %v392, 0.99
    %v433 = vmul.f32 %v425, 0.002
    %v434 = vmul.f32 %v426, 0.002
    %v435 = vmul.f32 %v427, 0.002
    %v436 = vmul.f32 %v428, 0.002
    %v437 = vadd.f32 %v429, %v433
    %v438 = vadd.f32 %v430, %v434
    %v439 = vadd.f32 %v431, %v435
    %v440 = vadd.f32 %v432, %v436
    %vm441 = vcmp.gt.f32.partialorder %v425, 30.0
    %vm442 = vcmp.gt.f32.partialorder %v426, 30.0
    %vm443 = vcmp.gt.f32.partialorder %v427, 30.0
    %vm444 = vcmp.gt.f32.partialorder %v428, 30.0
    %v445 = vsel %vm441, -65.0, %v425
    %v446 = vsel %vm442, -65.0, %v426
    %v447 = vsel %vm443, -65.0, %v427
    %v448 = vsel %vm444, -65.0, %v428
    %v449 = vadd.f32 %v437, 8.0
    %v450 = vadd.f32 %v438, 8.0
    %v451 = vadd.f32 %v439, 8.0
    %v452 = vadd.f32 %v440, 8.0
    %v453 = vsel %vm441, %v449, %v437
    %v454 = vsel %vm442, %v450, %v438
    %v455 = vsel %vm443, %v451, %v439
    %v456 = vsel %vm444, %v452, %v440
    %v457 = vadd.f32 %v397, 1.0
    %v458 = vadd.f32 %v398, 1.0
    %v459 = vadd.f32 %v399, 1.0
    %v460 = vadd.f32 %v400, 1.0
    %v461 = vsel %vm441, %v457, %v397
    %v462 = vsel %vm442, %v458, %v398
    %v463 = vsel %vm443, %v459, %v399
    %v464 = vsel %vm444, %v460, %v400
    %v465 = vmul.f32 %v445, %v445
    %v466 = vmul.f32 %v446, %v446
    %v467 = vmul.f32 %v447, %v447
    %v468 = vmul.f32 %v448, %v448
    %v469 = vmul.f32 %v465, 0.02
    %v470 = vmul.f32 %v466, 0.02
    %v471 = vmul.f32 %v467, 0.02
    %v472 = vmul.f32 %v468, 0.02
    %v473 = vmul.f32 %v445, 3.5
    %v474 = vmul.f32 %v446, 3.5
    %v475 = vmul.f32 %v447, 3.5
    %v476 = vmul.f32 %v448, 3.5
    %v477 = vadd.f32 %v469, %v473
    %v478 = vadd.f32 %v470, %v474
    %v479 = vadd.f32 %v471, %v475
    %v480 = vadd.f32 %v472, %v476
    %v481 = vmul.f32 %v453, 0.5
    %v482 = vmul.f32 %v454, 0.5
    %v483 = vmul.f32 %v455, 0.5
    %v484 = vmul.f32 %v456, 0.5
    %v485 = vsub.f32 %v477, %v481
    %v486 = vsub.f32 %v478, %v482
    %v487 = vsub.f32 %v479, %v483
    %v488 = vsub.f32 %v480, %v484
    %v489 = vadd.f32 %v485, %v173
    %v490 = vadd.f32 %v486, %v174
    %v491 = vadd.f32 %v487, %v175
    %v492 = vadd.f32 %v488, %v176
    %v493 = vmul.f32 %v453, 0.99
    %v494 = vmul.f32 %v454, 0.99
    %v495 = vmul.f32 %v455, 0.99
    %v496 = vmul.f32 %v456, 0.99
    %v497 = vmul.f32 %v489, 0.002
    %v498 = vmul.f32 %v490, 0.002
    %v499 = vmul.f32 %v491, 0.002
    %v500 = vmul.f32 %v492, 0.002
    %v501 = vadd.f32 %v493, %v497
    %v502 = vadd.f32 %v494, %v498
    %v503 = vadd.f32 %v495, %v499
    %v504 = vadd.f32 %v496, %v500
    %vm505 = vcmp.gt.f32.partialorder %v489, 30.0
    %vm506 = vcmp.gt.f32.partialorder %v490, 30.0
    %vm507 = vcmp.gt.f32.partialorder %v491, 30.0
    %vm508 = vcmp.gt.f32.partialorder %v492, 30.0
    %v509 = vsel %vm505, -65.0, %v489
    %v510 = vsel %vm506, -65.0, %v490
    %v511 = vsel %vm507, -65.0, %v491
    %v512 = vsel %vm508, -65.0, %v492
    %v513 = vadd.f32 %v501, 8.0
    %v514 = vadd.f32 %v502, 8.0
    %v515 = vadd.f32 %v503, 8.0
    %v516 = vadd.f32 %v504, 8.0
    %v517 = vsel %vm505, %v513, %v501
    %v518 = vsel %vm506, %v514, %v502
    %v519 = vsel %vm507, %v515, %v503
    %v520 = vsel %vm508, %v516, %v504
    %v521 = vadd.f32 %v461, 1.0
    %v522 = vadd.f32 %v462, 1.0
    %v523 = vadd.f32 %v463, 1.0
    %v524 = vadd.f32 %v464, 1.0
    %v525 = vsel %vm505, %v521, %v461
    %v526 = vsel %vm506, %v522, %v462
    %v527 = vsel %vm507, %v523, %v463
    %v528 = vsel %vm508, %v524, %v464
    %v529 = vmul.f32 %v509, %v509
    %v530 = vmul.f32 %v510, %v510
    %v531 = vmul.f32 %v511, %v511
    %v532 = vmul.f32 %v512, %v512
    %v533 = vmul.f32 %v529, 0.02
    %v534 = vmul.f32 %v530, 0.02
    %v535 = vmul.f32 %v531, 0.02
    %v536 = vmul.f32 %v532, 0.02
    %v537 = vmul.f32 %v509, 3.5
    %v538 = vmul.f32 %v510, 3.5
    %v539 = vmul.f32 %v511, 3.5
    %v540 = vmul.f32 %v512, 3.5
    %v541 = vadd.f32 %v533, %v537
    %v542 = vadd.f32 %v534, %v538
    %v543 = vadd.f32 %v535, %v539
    %v544 = vadd.f32 %v536, %v540
    %v545 = vmul.f32 %v517, 0.5
    %v546 = vmul.f32 %v518, 0.5
    %v547 = vmul.f32 %v519, 0.5
    %v548 = vmul.f32 %v520, 0.5
    %v549 = vsub.f32 %v541, %v545
    %v550 = vsub.f32 %v542, %v546
    %v551 = vsub.f32 %v543, %v547
    %v552 = vsub.f32 %v544, %v548
    %v553 = vadd.f32 %v549, %v173
    %v554 = vadd.f32 %v550, %v174
    %v555 = vadd.f32 %v551, %v175
    %v556 = vadd.f32 %v552, %v176
    %v557 = vmul.f32 %v517, 0.99
    %v558 = vmul.f32 %v518, 0.99
    %v559 = vmul.f32 %v519, 0.99
    %v560 = vmul.f32 %v520, 0.99
    %v561 = vmul.f32 %v553, 0.002
    %v562 = vmul.f32 %v554, 0.002
    %v563 = vmul.f32 %v555, 0.002
    %v564 = vmul.f32 %v556, 0.002
    %v565 = vadd.f32 %v557, %v561
    %v566 = vadd.f32 %v558, %v562
    %v567 = vadd.f32 %v559, %v563
    %v568 = vadd.f32 %v560, %v564
    %vm569 = vcmp.gt.f32.partialorder %v553, 30.0
    %vm570 = vcmp.gt.f32.partialorder %v554, 30.0
    %vm571 = vcmp.gt.f32.partialorder %v555, 30.0
    %vm572 = vcmp.gt.f32.partialorder %v556, 30.0
    %v573 = vsel %vm569, -65.0, %v553
    %v574 = vsel %vm570, -65.0, %v554
    %v575 = vsel %vm571, -65.0, %v555
    %v576 = vsel %vm572, -65.0, %v556
    %v577 = vadd.f32 %v565, 8.0
    %v578 = vadd.f32 %v566, 8.0
    %v579 = vadd.f32 %v567, 8.0
    %v580 = vadd.f32 %v568, 8.0
    %v581 = vsel %vm569, %v577, %v565
    %v582 = vsel %vm570, %v578, %v566
    %v583 = vsel %vm571, %v579, %v567
    %v584 = vsel %vm572, %v580, %v568
    %v585 = vadd.f32 %v525, 1.0
    %v586 = vadd.f32 %v526, 1.0
    %v587 = vadd.f32 %v527, 1.0
    %v588 = vadd.f32 %v528, 1.0
    %v589 = vsel %vm569, %v585, %v525
    %v590 = vsel %vm570, %v586, %v526
    %v591 = vsel %vm571, %v587, %v527
    %v592 = vsel %vm572, %v588, %v528
    %v593 = vmul.f32 %v573, %v573
    %v594 = vmul.f32 %v574, %v574
    %v595 = vmul.f32 %v575, %v575
    %v596 = vmul.f32 %v576, %v576
    %v597 = vmul.f32 %v593, 0.02
    %v598 = vmul.f32 %v594, 0.02
    %v599 = vmul.f32 %v595, 0.02
    %v600 = vmul.f32 %v596, 0.02
    %v601 = vmul.f32 %v573, 3.5
    %v602 = vmul.f32 %v574, 3.5
    %v603 = vmul.f32 %v575, 3.5
    %v604 = vmul.f32 %v576, 3.5
    %v605 = vadd.f32 %v597, %v601
    %v606 = vadd.f32 %v598, %v602
    %v607 = vadd.f32 %v599, %v603
    %v608 = vadd.f32 %v600, %v604
    %v609 = vmul.f32 %v581, 0.5
    %v610 = vmul.f32 %v582, 0.5
    %v611 = vmul.f32 %v583, 0.5
    %v612 = vmul.f32 %v584, 0.5
    %v613 = vsub.f32 %v605, %v609
    %v614 = vsub.f32 %v606, %v610
    %v615 = vsub.f32 %v607, %v611
    %v616 = vsub.f32 %v608, %v612
    %v617 = vadd.f32 %v613, %v173
    %v618 = vadd.f32 %v614, %v174
    %v619 = vadd.f32 %v615, %v175
    %v620 = vadd.f32 %v616, %v176
    %v621 = vmul.f32 %v581, 0.99
    %v622 = vmul.f32 %v582, 0.99
    %v623 = vmul.f32 %v583, 0.99
    %v624 = vmul.f32 %v584, 0.99
    %v625 = vmul.f32 %v617, 0.002
    %v626 = vmul.f32 %v618, 0.002
    %v627 = vmul.f32 %v619, 0.002
    %v628 = vmul.f32 %v620, 0.002
    %v629 = vadd.f32 %v621, %v625
    %v630 = vadd.f32 %v622, %v626
    %v631 = vadd.f32 %v623, %v627
    %v632 = vadd.f32 %v624, %v628
    %vm633 = vcmp.gt.f32.partialorder %v617, 30.0
    %vm634 = vcmp.gt.f32.partialorder %v618, 30.0
    %vm635 = vcmp.gt.f32.partialorder %v619, 30.0
    %vm636 = vcmp.gt.f32.partialorder %v620, 30.0
    %v637 = vsel %vm633, -65.0, %v617
    %v638 = vsel %vm634, -65.0, %v618
    %v639 = vsel %vm635, -65.0, %v619
    %v640 = vsel %vm636, -65.0, %v620
    %v641 = vadd.f32 %v629, 8.0
    %v642 = vadd.f32 %v630, 8.0
    %v643 = vadd.f32 %v631, 8.0
    %v644 = vadd.f32 %v632, 8.0
    %v645 = vsel %vm633, %v641, %v629
    %v646 = vsel %vm634, %v642, %v630
    %v647 = vsel %vm635, %v643, %v631
    %v648 = vsel %vm636, %v644, %v632
    %v649 = vadd.f32 %v589, 1.0
    %v650 = vadd.f32 %v590, 1.0
    %v651 = vadd.f32 %v591, 1.0
    %v652 = vadd.f32 %v592, 1.0
    %v653 = vsel %vm633, %v649, %v589
    %v654 = vsel %vm634, %v650, %v590
    %v655 = vsel %vm635, %v651, %v591
    %v656 = vsel %vm636, %v652, %v592
    %v657 = vmul.f32 %v637, %v637
    %v658 = vmul.f32 %v638, %v638
    %v659 = vmul.f32 %v639, %v639
    %v660 = vmul.f32 %v640, %v640
    %v661 = vmul.f32 %v657, 0.02
    %v662 = vmul.f32 %v658, 0.02
    %v663 = vmul.f32 %v659, 0.02
    %v664 = vmul.f32 %v660, 0.02
    %v665 = vmul.f32 %v637, 3.5
    %v666 = vmul.f32 %v638, 3.5
    %v667 = vmul.f32 %v639, 3.5
    %v668 = vmul.f32 %v640, 3.5
    %v669 = vadd.f32 %v661, %v665
    %v670 = vadd.f32 %v662, %v666
    %v671 = vadd.f32 %v663, %v667
    %v672 = vadd.f32 %v664, %v668
    %v673 = vmul.f32 %v645, 0.5
    %v674 = vmul.f32 %v646, 0.5
    %v675 = vmul.f32 %v647, 0.5
    %v676 = vmul.f32 %v648, 0.5
    %v677 = vsub.f32 %v669, %v673
    %v678 = vsub.f32 %v670, %v674
    %v679 = vsub.f32 %v671, %v675
    %v680 = vsub.f32 %v672, %v676
    %v681 = vadd.f32 %v677, %v173
    %v682 = vadd.f32 %v678, %v174
    %v683 = vadd.f32 %v679, %v175
    %v684 = vadd.f32 %v680, %v176
    %v685 = vmul.f32 %v645, 0.99
    %v686 = vmul.f32 %v646, 0.99
    %v687 = vmul.f32 %v647, 0.99
    %v688 = vmul.f32 %v648, 0.99
    %v689 = vmul.f32 %v681, 0.002
    %v690 = vmul.f32 %v682, 0.002
    %v691 = vmul.f32 %v683, 0.002
    %v692 = vmul.f32 %v684, 0.002
    %v693 = vadd.f32 %v685, %v689
    %v694 = vadd.f32 %v686, %v690
    %v695 = vadd.f32 %v687, %v691
    %v696 = vadd.f32 %v688, %v692
    %vm697 = vcmp.gt.f32.partialorder %v681, 30.0
    %vm698 = vcmp.gt.f32.partialorder %v682, 30.0
    %vm699 = vcmp.gt.f32.partialorder %v683, 30.0
    %vm700 = vcmp.gt.f32.partialorder %v684, 30.0
    %v701 = vsel %vm697, -65.0, %v681
    %v702 = vsel %vm698, -65.0, %v682
    %v703 = vsel %vm699, -65.0, %v683
    %v704 = vsel %vm700, -65.0, %v684
    %v705 = vadd.f32 %v693, 8.0
    %v706 = vadd.f32 %v694, 8.0
    %v707 = vadd.f32 %v695, 8.0
    %v708 = vadd.f32 %v696, 8.0
    %v709 = vsel %vm697, %v705, %v693
    %v710 = vsel %vm698, %v706, %v694
    %v711 = vsel %vm699, %v707, %v695
    %v712 = vsel %vm700, %v708, %v696
    %v713 = vadd.f32 %v653, 1.0
    %v714 = vadd.f32 %v654, 1.0
    %v715 = vadd.f32 %v655, 1.0
    %v716 = vadd.f32 %v656, 1.0
    %v717 = vsel %vm697, %v713, %v653
    %v718 = vsel %vm698, %v714, %v654
    %v719 = vsel %vm699, %v715, %v655
    %v720 = vsel %vm700, %v716, %v656
    %v721 = vmul.f32 %v701, %v701
    %v722 = vmul.f32 %v702, %v702
    %v723 = vmul.f32 %v703, %v703
    %v724 = vmul.f32 %v704, %v704
    %v725 = vmul.f32 %v721, 0.02
    %v726 = vmul.f32 %v722, 0.02
    %v727 = vmul.f32 %v723, 0.02
    %v728 = vmul.f32 %v724, 0.02
    %v729 = vmul.f32 %v701, 3.5
    %v730 = vmul.f32 %v702, 3.5
    %v731 = vmul.f32 %v703, 3.5
    %v732 = vmul.f32 %v704, 3.5
    %v733 = vadd.f32 %v725, %v729
    %v734 = vadd.f32 %v726, %v730
    %v735 = vadd.f32 %v727, %v731
    %v736 = vadd.f32 %v728, %v732
    %v737 = vmul.f32 %v709, 0.5
    %v738 = vmul.f32 %v710, 0.5
    %v739 = vmul.f32 %v711, 0.5
    %v740 = vmul.f32 %v712, 0.5
    %v741 = vsub.f32 %v733, %v737
    %v742 = vsub.f32 %v734, %v738
    %v743 = vsub.f32 %v735, %v739
    %v744 = vsub.f32 %v736, %v740
    %v745 = vadd.f32 %v741, %v173
    %v746 = vadd.f32 %v742, %v174
    %v747 = vadd.f32 %v743, %v175
    %v748 = vadd.f32 %v744, %v176
    %v749 = vmul.f32 %v709, 0.99
    %v750 = vmul.f32 %v710, 0.99
    %v751 = vmul.f32 %v711, 0.99
    %v752 = vmul.f32 %v712, 0.99
    %v753 = vmul.f32 %v745, 0.002
    %v754 = vmul.f32 %v746, 0.002
    %v755 = vmul.f32 %v747, 0.002
    %v756 = vmul.f32 %v748, 0.002
    %v757 = vadd.f32 %v749, %v753
    %v758 = vadd.f32 %v750, %v754
    %v759 = vadd.f32 %v751, %v755
    %v760 = vadd.f32 %v752, %v756
    %vm761 = vcmp.gt.f32.partialorder %v745, 30.0
    %vm762 = vcmp.gt.f32.partialorder %v746, 30.0
    %vm763 = vcmp.gt.f32.partialorder %v747, 30.0
    %vm764 = vcmp.gt.f32.partialorder %v748, 30.0
    %v765 = vsel %vm761, -65.0, %v745
    %v766 = vsel %vm762, -65.0, %v746
    %v767 = vsel %vm763, -65.0, %v747
    %v768 = vsel %vm764, -65.0, %v748
    %v769 = vadd.f32 %v757, 8.0
    %v770 = vadd.f32 %v758, 8.0
    %v771 = vadd.f32 %v759, 8.0
    %v772 = vadd.f32 %v760, 8.0
    %v773 = vsel %vm761, %v769, %v757
    %v774 = vsel %vm762, %v770, %v758
    %v775 = vsel %vm763, %v771, %v759
    %v776 = vsel %vm764, %v772, %v760
    %v777 = vadd.f32 %v717, 1.0
    %v778 = vadd.f32 %v718, 1.0
    %v779 = vadd.f32 %v719, 1.0
    %v780 = vadd.f32 %v720, 1.0
    %v781 = vsel %vm761, %v777, %v717
    %v782 = vsel %vm762, %v778, %v718
    %v783 = vsel %vm763, %v779, %v719
    %v784 = vsel %vm764, %v780, %v720
    %v785 = vmul.f32 %v765, %v765
    %v786 = vmul.f32 %v766, %v766
    %v787 = vmul.f32 %v767, %v767
    %v788 = vmul.f32 %v768, %v768
    %v789 = vmul.f32 %v785, 0.02
    %v790 = vmul.f32 %v786, 0.02
    %v791 = vmul.f32 %v787, 0.02
    %v792 = vmul.f32 %v788, 0.02
    %v793 = vmul.f32 %v765, 3.5
    %v794 = vmul.f32 %v766, 3.5
    %v795 = vmul.f32 %v767, 3.5
    %v796 = vmul.f32 %v768, 3.5
    %v797 = vadd.f32 %v789, %v793
    %v798 = vadd.f32 %v790, %v794
    %v799 = vadd.f32 %v791, %v795
    %v800 = vadd.f32 %v792, %v796
    %v801 = vmul.f32 %v773, 0.5
    %v802 = vmul.f32 %v774, 0.5
    %v803 = vmul.f32 %v775, 0.5
    %v804 = vmul.f32 %v776, 0.5
    %v805 = vsub.f32 %v797, %v801
    %v806 = vsub.f32 %v798, %v802
    %v807 = vsub.f32 %v799, %v803
    %v808 = vsub.f32 %v800, %v804
    %v809 = vadd.f32 %v805, %v173
    %v810 = vadd.f32 %v806, %v174
    %v811 = vadd.f32 %v807, %v175
    %v812 = vadd.f32 %v808, %v176
    %v813 = vmul.f32 %v773, 0.99
    %v814 = vmul.f32 %v774, 0.99
    %v815 = vmul.f32 %v775, 0.99
    %v816 = vmul.f32 %v776, 0.99
    %v817 = vmul.f32 %v809, 0.002
    %v818 = vmul.f32 %v810, 0.002
    %v819 = vmul.f32 %v811, 0.002
    %v820 = vmul.f32 %v812, 0.002
    %v821 = vadd.f32 %v813, %v817
    %v822 = vadd.f32 %v814, %v818
    %v823 = vadd.f32 %v815, %v819
    %v824 = vadd.f32 %v816, %v820
    %vm825 = vcmp.gt.f32.partialorder %v809, 30.0
    %vm826 = vcmp.gt.f32.partialorder %v810, 30.0
    %vm827 = vcmp.gt.f32.partialorder %v811, 30.0
    %vm828 = vcmp.gt.f32.partialorder %v812, 30.0
    %v829 = vsel %vm825, -65.0, %v809
    %v830 = vsel %vm826, -65.0, %v810
    %v831 = vsel %vm827, -65.0, %v811
    %v832 = vsel %vm828, -65.0, %v812
    %v833 = vadd.f32 %v821, 8.0
    %v834 = vadd.f32 %v822, 8.0
    %v835 = vadd.f32 %v823, 8.0
    %v836 = vadd.f32 %v824, 8.0
    %v837 = vsel %vm825, %v833, %v821
    %v838 = vsel %vm826, %v834, %v822
    %v839 = vsel %vm827, %v835, %v823
    %v840 = vsel %vm828, %v836, %v824
    %v841 = vadd.f32 %v781, 1.0
    %v842 = vadd.f32 %v782, 1.0
    %v843 = vadd.f32 %v783, 1.0
    %v844 = vadd.f32 %v784, 1.0
    %v845 = vsel %vm825, %v841, %v781
    %v846 = vsel %vm826, %v842, %v782
    %v847 = vsel %vm827, %v843, %v783
    %v848 = vsel %vm828, %v844, %v784
    %v849 = vmul.f32 %v829, %v829
    %v850 = vmul.f32 %v830, %v830
    %v851 = vmul.f32 %v831, %v831
    %v852 = vmul.f32 %v832, %v832
    %v853 = vmul.f32 %v849, 0.02
    %v854 = vmul.f32 %v850, 0.02
    %v855 = vmul.f32 %v851, 0.02
    %v856 = vmul.f32 %v852, 0.02
    %v857 = vmul.f32 %v829, 3.5
    %v858 = vmul.f32 %v830, 3.5
    %v859 = vmul.f32 %v831, 3.5
    %v860 = vmul.f32 %v832, 3.5
    %v861 = vadd.f32 %v853, %v857
    %v862 = vadd.f32 %v854, %v858
    %v863 = vadd.f32 %v855, %v859
    %v864 = vadd.f32 %v856, %v860
    %v865 = vmul.f32 %v837, 0.5
    %v866 = vmul.f32 %v838, 0.5
    %v867 = vmul.f32 %v839, 0.5
    %v868 = vmul.f32 %v840, 0.5
    %v869 = vsub.f32 %v861, %v865
    %v870 = vsub.f32 %v862, %v866
    %v871 = vsub.f32 %v863, %v867
    %v872 = vsub.f32 %v864, %v868
    %v873 = vadd.f32 %v869, %v173
    %v874 = vadd.f32 %v870, %v174
    %v875 = vadd.f32 %v871, %v175
    %v876 = vadd.f32 %v872, %v176
    %v877 = vmul.f32 %v837, 0.99
    %v878 = vmul.f32 %v838, 0.99
    %v879 = vmul.f32 %v839, 0.99
    %v880 = vmul.f32 %v840, 0.99
    %v881 = vmul.f32 %v873, 0.002
    %v882 = vmul.f32 %v874, 0.002
    %v883 = vmul.f32 %v875, 0.002
    %v884 = vmul.f32 %v876, 0.002
    %v885 = vadd.f32 %v877, %v881
    %v886 = vadd.f32 %v878, %v882
    %v887 = vadd.f32 %v879, %v883
    %v888 = vadd.f32 %v880, %v884
    %vm889 = vcmp.gt.f32.partialorder %v873, 30.0
    %vm890 = vcmp.gt.f32.partialorder %v874, 30.0
    %vm891 = vcmp.gt.f32.partialorder %v875, 30.0
    %vm892 = vcmp.gt.f32.partialorder %v876, 30.0
    %v893 = vsel %vm889, -65.0, %v873
    %v894 = vsel %vm890, -65.0, %v874
    %v895 = vsel %vm891, -65.0, %v875
    %v896 = vsel %vm892, -65.0, %v876
    %v897 = vadd.f32 %v885, 8.0
    %v898 = vadd.f32 %v886, 8.0
    %v899 = vadd.f32 %v887, 8.0
    %v900 = vadd.f32 %v888, 8.0
    %v901 = vsel %vm889, %v897, %v885
    %v902 = vsel %vm890, %v898, %v886
    %v903 = vsel %vm891, %v899, %v887
    %v904 = vsel %vm892, %v900, %v888
    %v905 = vadd.f32 %v845, 1.0
    %v906 = vadd.f32 %v846, 1.0
    %v907 = vadd.f32 %v847, 1.0
    %v908 = vadd.f32 %v848, 1.0
    %v909 = vsel %vm889, %v905, %v845
    %v910 = vsel %vm890, %v906, %v846
    %v911 = vsel %vm891, %v907, %v847
    %v912 = vsel %vm892, %v908, %v848
    %v913 = vmul.f32 %v893, %v893
    %v914 = vmul.f32 %v894, %v894
    %v915 = vmul.f32 %v895, %v895
    %v916 = vmul.f32 %v896, %v896
    %v917 = vmul.f32 %v913, 0.02
    %v918 = vmul.f32 %v914, 0.02
    %v919 = vmul.f32 %v915, 0.02
    %v920 = vmul.f32 %v916, 0.02
    %v921 = vmul.f32 %v893, 3.5
    %v922 = vmul.f32 %v894, 3.5
    %v923 = vmul.f32 %v895, 3.5
    %v924 = vmul.f32 %v896, 3.5
    %v925 = vadd.f32 %v917, %v921
    %v926 = vadd.f32 %v918, %v922
    %v927 = vadd.f32 %v919, %v923
    %v928 = vadd.f32 %v920, %v924
    %v929 = vmul.f32 %v901, 0.5
    %v930 = vmul.f32 %v902, 0.5
    %v931 = vmul.f32 %v903, 0.5
    %v932 = vmul.f32 %v904, 0.5
    %v933 = vsub.f32 %v925, %v929
    %v934 = vsub.f32 %v926, %v930
    %v935 = vsub.f32 %v927, %v931
    %v936 = vsub.f32 %v928, %v932
    %v937 = vadd.f32 %v933, %v173
    %v938 = vadd.f32 %v934, %v174
    %v939 = vadd.f32 %v935, %v175
    %v940 = vadd.f32 %v936, %v176
    %v941 = vmul.f32 %v901, 0.99
    %v942 = vmul.f32 %v902, 0.99
    %v943 = vmul.f32 %v903, 0.99
    %v944 = vmul.f32 %v904, 0.99
    %v945 = vmul.f32 %v937, 0.002
    %v946 = vmul.f32 %v938, 0.002
    %v947 = vmul.f32 %v939, 0.002
    %v948 = vmul.f32 %v940, 0.002
    %v949 = vadd.f32 %v941, %v945
    %v950 = vadd.f32 %v942, %v946
    %v951 = vadd.f32 %v943, %v947
    %v952 = vadd.f32 %v944, %v948
    %vm953 = vcmp.gt.f32.partialorder %v937, 30.0
    %vm954 = vcmp.gt.f32.partialorder %v938, 30.0
    %vm955 = vcmp.gt.f32.partialorder %v939, 30.0
    %vm956 = vcmp.gt.f32.partialorder %v940, 30.0
    %v957 = vsel %vm953, -65.0, %v937
    %v958 = vsel %vm954, -65.0, %v938
    %v959 = vsel %vm955, -65.0, %v939
    %v960 = vsel %vm956, -65.0, %v940
    %v961 = vadd.f32 %v949, 8.0
    %v962 = vadd.f32 %v950, 8.0
    %v963 = vadd.f32 %v951, 8.0
    %v964 = vadd.f32 %v952, 8.0
    %v965 = vsel %vm953, %v961, %v949
    %v966 = vsel %vm954, %v962, %v950
    %v967 = vsel %vm955, %v963, %v951
    %v968 = vsel %vm956, %v964, %v952
    %v969 = vadd.f32 %v909, 1.0
    %v970 = vadd.f32 %v910, 1.0
    %v971 = vadd.f32 %v911, 1.0
    %v972 = vadd.f32 %v912, 1.0
    %v973 = vsel %vm953, %v969, %v909
    %v974 = vsel %vm954, %v970, %v910
    %v975 = vsel %vm955, %v971, %v911
    %v976 = vsel %vm956, %v972, %v912
    %v977 = vmul.f32 %v957, %v957
    %v978 = vmul.f32 %v958, %v958
    %v979 = vmul.f32 %v959, %v959
    %v980 = vmul.f32 %v960, %v960
    %v981 = vmul.f32 %v977, 0.02
    %v982 = vmul.f32 %v978, 0.02
    %v983 = vmul.f32 %v979, 0.02
    %v984 = vmul.f32 %v980, 0.02
    %v985 = vmul.f32 %v957, 3.5
    %v986 = vmul.f32 %v958, 3.5
    %v987 = vmul.f32 %v959, 3.5
    %v988 = vmul.f32 %v960, 3.5
    %v989 = vadd.f32 %v981, %v985
    %v990 = vadd.f32 %v982, %v986
    %v991 = vadd.f32 %v983, %v987
    %v992 = vadd.f32 %v984, %v988
    %v993 = vmul.f32 %v965, 0.5
    %v994 = vmul.f32 %v966, 0.5
    %v995 = vmul.f32 %v967, 0.5
    %v996 = vmul.f32 %v968, 0.5
    %v997 = vsub.f32 %v989, %v993
    %v998 = vsub.f32 %v990, %v994
    %v999 = vsub.f32 %v991, %v995
    %v1000 = vsub.f32 %v992, %v996
    %v1001 = vadd.f32 %v997, %v173
    %v1002 = vadd.f32 %v998, %v174
    %v1003 = vadd.f32 %v999, %v175
    %v1004 = vadd.f32 %v1000, %v176
    %v1005 = vmul.f32 %v965, 0.99
    %v1006 = vmul.f32 %v966, 0.99
    %v1007 = vmul.f32 %v967, 0.99
    %v1008 = vmul.f32 %v968, 0.99
    %v1009 = vmul.f32 %v1001, 0.002
    %v1010 = vmul.f32 %v1002, 0.002
    %v1011 = vmul.f32 %v1003, 0.002
    %v1012 = vmul.f32 %v1004, 0.002
    %v1013 = vadd.f32 %v1005, %v1009
    %v1014 = vadd.f32 %v1006, %v1010
    %v1015 = vadd.f32 %v1007, %v1011
    %v1016 = vadd.f32 %v1008, %v1012
    %vm1017 = vcmp.gt.f32.partialorder %v1001, 30.0
    %vm1018 = vcmp.gt.f32.partialorder %v1002, 30.0
    %vm1019 = vcmp.gt.f32.partialorder %v1003, 30.0
    %vm1020 = vcmp.gt.f32.partialorder %v1004, 30.0
    %v1021 = vsel %vm1017, -65.0, %v1001
    %v1022 = vsel %vm1018, -65.0, %v1002
    %v1023 = vsel %vm1019, -65.0, %v1003
    %v1024 = vsel %vm1020, -65.0, %v1004
    %v1025 = vadd.f32 %v1013, 8.0
    %v1026 = vadd.f32 %v1014, 8.0
    %v1027 = vadd.f32 %v1015, 8.0
    %v1028 = vadd.f32 %v1016, 8.0
    %v1029 = vsel %vm1017, %v1025, %v1013
    %v1030 = vsel %vm1018, %v1026, %v1014
    %v1031 = vsel %vm1019, %v1027, %v1015
    %v1032 = vsel %vm1020, %v1028, %v1016
    %v1033 = vadd.f32 %v973, 1.0
    %v1034 = vadd.f32 %v974, 1.0
    %v1035 = vadd.f32 %v975, 1.0
    %v1036 = vadd.f32 %v976, 1.0
    %v1037 = vsel %vm1017, %v1033, %v973
    %v1038 = vsel %vm1018, %v1034, %v974
    %v1039 = vsel %vm1019, %v1035, %v975
    %v1040 = vsel %vm1020, %v1036, %v976
    %v1041 = vmul.f32 %v1021, %v1021
    %v1042 = vmul.f32 %v1022, %v1022
    %v1043 = vmul.f32 %v1023, %v1023
    %v1044 = vmul.f32 %v1024, %v1024
    %v1045 = vmul.f32 %v1041, 0.02
    %v1046 = vmul.f32 %v1042, 0.02
    %v1047 = vmul.f32 %v1043, 0.02
    %v1048 = vmul.f32 %v1044, 0.02
    %v1049 = vmul.f32 %v1021, 3.5
    %v1050 = vmul.f32 %v1022, 3.5
    %v1051 = vmul.f32 %v1023, 3.5
    %v1052 = vmul.f32 %v1024, 3.5
    %v1053 = vadd.f32 %v1045, %v1049
    %v1054 = vadd.f32 %v1046, %v1050
    %v1055 = vadd.f32 %v1047, %v1051
    %v1056 = vadd.f32 %v1048, %v1052
    %v1057 = vmul.f32 %v1029, 0.5
    %v1058 = vmul.f32 %v1030, 0.5
    %v1059 = vmul.f32 %v1031, 0.5
    %v1060 = vmul.f32 %v1032, 0.5
    %v1061 = vsub.f32 %v1053, %v1057
    %v1062 = vsub.f32 %v1054, %v1058
    %v1063 = vsub.f32 %v1055, %v1059
    %v1064 = vsub.f32 %v1056, %v1060
    %v1065 = vadd.f32 %v1061, %v173
    %v1066 = vadd.f32 %v1062, %v174
    %v1067 = vadd.f32 %v1063, %v175
    %v1068 = vadd.f32 %v1064, %v176
    %v1069 = vmul.f32 %v1029, 0.99
    %v1070 = vmul.f32 %v1030, 0.99
    %v1071 = vmul.f32 %v1031, 0.99
    %v1072 = vmul.f32 %v1032, 0.99
    %v1073 = vmul.f32 %v1065, 0.002
    %v1074 = vmul.f32 %v1066, 0.002
    %v1075 = vmul.f32 %v1067, 0.002
    %v1076 = vmul.f32 %v1068, 0.002
    %v1077 = vadd.f32 %v1069, %v1073
    %v1078 = vadd.f32 %v1070, %v1074
    %v1079 = vadd.f32 %v1071, %v1075
    %v1080 = vadd.f32 %v1072, %v1076
    %vm1081 = vcmp.gt.f32.partialorder %v1065, 30.0
    %vm1082 = vcmp.gt.f32.partialorder %v1066, 30.0
    %vm1083 = vcmp.gt.f32.partialorder %v1067, 30.0
    %vm1084 = vcmp.gt.f32.partialorder %v1068, 30.0
    %v1085 = vsel %vm1081, -65.0, %v1065
    %v1086 = vsel %vm1082, -65.0, %v1066
    %v1087 = vsel %vm1083, -65.0, %v1067
    %v1088 = vsel %vm1084, -65.0, %v1068
    %v1089 = vadd.f32 %v1077, 8.0
    %v1090 = vadd.f32 %v1078, 8.0
    %v1091 = vadd.f32 %v1079, 8.0
    %v1092 = vadd.f32 %v1080, 8.0
    %v1093 = vsel %vm1081, %v1089, %v1077
    %v1094 = vsel %vm1082, %v1090, %v1078
    %v1095 = vsel %vm1083, %v1091, %v1079
    %v1096 = vsel %vm1084, %v1092, %v1080
    %v1097 = vadd.f32 %v1037, 1.0
    %v1098 = vadd.f32 %v1038, 1.0
    %v1099 = vadd.f32 %v1039, 1.0
    %v1100 = vadd.f32 %v1040, 1.0
    %v1101 = vsel %vm1081, %v1097, %v1037
    %v1102 = vsel %vm1082, %v1098, %v1038
    %v1103 = vsel %vm1083, %v1099, %v1039
    %v1104 = vsel %vm1084, %v1100, %v1040
    %v1105 = vmul.f32 %v1085, %v1085
    %v1106 = vmul.f32 %v1086, %v1086
    %v1107 = vmul.f32 %v1087, %v1087
    %v1108 = vmul.f32 %v1088, %v1088
    %v1109 = vmul.f32 %v1105, 0.02
    %v1110 = vmul.f32 %v1106, 0.02
    %v1111 = vmul.f32 %v1107, 0.02
    %v1112 = vmul.f32 %v1108, 0.02
    %v1113 = vmul.f32 %v1085, 3.5
    %v1114 = vmul.f32 %v1086, 3.5
    %v1115 = vmul.f32 %v1087, 3.5
    %v1116 = vmul.f32 %v1088, 3.5
    %v1117 = vadd.f32 %v1109, %v1113
    %v1118 = vadd.f32 %v1110, %v1114
    %v1119 = vadd.f32 %v1111, %v1115
    %v1120 = vadd.f32 %v1112, %v1116
    %v1121 = vmul.f32 %v1093, 0.5
    %v1122 = vmul.f32 %v1094, 0.5
    %v1123 = vmul.f32 %v1095, 0.5
    %v1124 = vmul.f32 %v1096, 0.5
    %v1125 = vsub.f32 %v1117, %v1121
    %v1126 = vsub.f32 %v1118, %v1122
    %v1127 = vsub.f32 %v1119, %v1123
    %v1128 = vsub.f32 %v1120, %v1124
    %v1129 = vadd.f32 %v1125, %v173
    %v1130 = vadd.f32 %v1126, %v174
    %v1131 = vadd.f32 %v1127, %v175
    %v1132 = vadd.f32 %v1128, %v176
    %vm1133 = vcmp.gt.f32.partialorder %v1129, 30.0
    %vm1134 = vcmp.gt.f32.partialorder %v1130, 30.0
    %vm1135 = vcmp.gt.f32.partialorder %v1131, 30.0
    %vm1136 = vcmp.gt.f32.partialorder %v1132, 30.0
    %v1137 = vadd.f32 %v1101, 1.0
    %v1138 = vadd.f32 %v1102, 1.0
    %v1139 = vadd.f32 %v1103, 1.0
    %v1140 = vadd.f32 %v1104, 1.0
    %v1141 = vsel %vm1133, %v1137, %v1101
    %v1142 = vsel %vm1134, %v1138, %v1102
    %v1143 = vsel %vm1135, %v1139, %v1103
    %v1144 = vsel %vm1136, %v1140, %v1104
    %v1145 = vmul.f32 %v1141, 0.0625
    %v1146 = vmul.f32 %v1142, 0.0625
    %v1147 = vmul.f32 %v1143, 0.0625
    %v1148 = vmul.f32 %v1144, 0.0625
    %1149 = vst [vmem:[#allocation9] sm:$0xff] %v1145
    %1150 = vst [vmem:[#allocation9 + $0x8] sm:$0xff] %v1146
    %1151 = vst [vmem:[#allocation9 + $0x10] sm:$0xff] %v1147
    %1152 = vst [vmem:[#allocation9 + $0x18] sm:$0xff] %v1148
    // Predicated region
    $region30: #{tpu_custom_call.1} parent=1 // pred_check
      _
    $region31: #{tpu_custom_call.1} parent=1 // pred_check_branch
      %1154 = sbr.rel (0) target = $region33
    $region32: #{tpu_custom_call.1} parent=1 // pred_region
      %1156 = vsyncadd [#allocation5], 0
      %s1157 = sshll.u32 [#allocation9], 4
      %s1158 = int_to_ptr.vmem [resolvable:$true] %s1157
      %s1159 = sshll.u32 %s4, 4
      %s1160 = int_to_ptr.hbm [resolvable:$true] %s1159
      %1165 = dma.vmem_to_hbm [thread:$0]  %s1158, 512, %s1160, [#allocation5], 128, 128, 8
    $region33: #{tpu_custom_call.1} parent=1 // pred_fallthru
      _
    // Predicated region
    $region34: #{tpu_custom_call.1} parent=1 // pred_check
      _
    $region35: #{tpu_custom_call.1} parent=1 // pred_check_branch
      %1167 = sbr.rel (0) target = $region37
    $region36: #{tpu_custom_call.1} parent=1 // pred_region
      %1169 = vsyncadd [#allocation11], 0
      %s1170 = sshll.u32 [#allocation10], 4
      %s1171 = int_to_ptr.vmem [resolvable:$true] %s1170
      %s1172 = sshll.u32 %s5, 4
      %s1173 = int_to_ptr.hbm [resolvable:$true] %s1172
      %1178 = dma.vmem_to_hbm [thread:$0]  %s1171, 512, %s1173, [#allocation11], 128, 128, 8
    $region37: #{tpu_custom_call.1} parent=1 // pred_fallthru
      _
    // Predicated region
    $region38: #{tpu_custom_call.1} parent=1 // pred_check
      _
    $region39: #{tpu_custom_call.1} parent=1 // pred_check_branch
      %1180 = sbr.rel (0) target = $region41
    $region40: #{tpu_custom_call.1} parent=1 // pred_region
      %1182 = dma.done [#allocation5], 512
    $region41: #{tpu_custom_call.1} parent=1 // pred_fallthru
      _
    // Predicated region
    $region42: #{tpu_custom_call.1} parent=1 // pred_check
      _
    $region43: #{tpu_custom_call.1} parent=1 // pred_check_branch
      %1184 = sbr.rel (0) target = $region45
    $region44: #{tpu_custom_call.1} parent=1 // pred_region
      %1186 = dma.done [#allocation11], 512
    $region45: #{tpu_custom_call.1} parent=1 // pred_fallthru
      _
    %1187 = vsyncpa [#allocation4], 1
    %1188 = vsyncpa [#allocation7], 1
    %1189 = vsyncpa [#allocation5], 1
    %1190 = vsyncpa [#allocation11], 1

</llo_original>
